<compile_context>
chip_gen: v7x
topology: tpu7x:2x2x1
jax: 0.10.0
libtpu: 0.0.40
codegen_flags: <defaults>
</compile_context>

<pallas_src>
import functools
import math

import jax
import jax.numpy as jnp
from jax.experimental import pallas as pl
from jax.experimental.pallas import tpu as pltpu


# ---------------------------------------------------------------------------
# Generation-aware sizing
# ---------------------------------------------------------------------------
def _round_up(x, m):
    return (x + m - 1) // m * m


def _conv_out(d):
    return (d - 3) // 2 + 1


def _slab_width(wout):
    # Slab / phase width for a conv layer: >= wout+1 (so the kw=2 tap is
    # reachable via a one-phase shift) and a multiple of 16 so all bf16
    # sublane reshapes inside the kernel are tile aligned.
    return _round_up(wout + 1, 16)


def _tpu_vmem_capacity_bytes():
    try:
        info = pltpu.get_tpu_info()
        cap = getattr(info, "vmem_capacity_bytes", None)
        if cap:
            return int(cap)
    except Exception:
        pass
    return 64 * 1024 * 1024  # conservative default (v7x per-TensorCore)


_VMEM_CAP = _tpu_vmem_capacity_bytes()
if _VMEM_CAP >= 96 * 1024 * 1024:            # v5e / v6e: 128 MiB VMEM
    _VMEM_LIMIT = 96 * 1024 * 1024
    _TT_MAX, _TM_MAX, _TK_MAX = 128, 1024, 4096
else:                                        # v7x: 64 MiB VMEM (or unknown)
    _VMEM_LIMIT = 48 * 1024 * 1024
    _TT_MAX, _TM_MAX, _TK_MAX = 64, 512, 2048


# ---------------------------------------------------------------------------
# Pallas kernel 1: direct 3x3 stride-2 conv + bias + ReLU (Cin > 1 layers)
# ---------------------------------------------------------------------------
def _conv3x3_s2_kernel(xg_ref, w01_ref, w2_ref, b_ref, o_ref):
    """Phase-decomposed 3x3/stride-2 conv tile.

    xg_ref : (1, tt, Fh, 6*Cin) bf16  channel blocks ordered (kw in {0,1}, kh, c)
    w01_ref: (6*Cin, CoutP)     bf16  taps kw=0,1 flattened (kw, kh, c)-major
    w2_ref : (3*Cin, CoutP)     bf16  taps kw=2   flattened (kh, c)-major
    b_ref  : (1, CoutP)         f32
    o_ref  : (1, tt*Fh, CoutP)  bf16  lane-dense output slab tile
    """
    _, tt, fh, c6 = xg_ref.shape
    c3 = c6 // 2
    coutp = o_ref.shape[2]

    xg = xg_ref[0]                                    # (tt, Fh, 6*Cin)

    # Taps (kh, kw in {0,1}): output col j reads phase j directly.
    # Fh % 16 == 0 -> the (tt, Fh) -> (tt*Fh) merge is tile aligned (free).
    a01 = xg.reshape(tt * fh, c6)

    # Taps (kh, kw=2): output col j reads parity-0 phase j+1 -> shift by one
    # phase.  jnp.roll lowers to an aligned-width slice + sublane concat; the
    # wrapped last column lands in a padding column that is never consumed.
    a2 = jnp.roll(xg[:, :, :c3], shift=-1, axis=1).reshape(tt * fh, c3)

    # Two large-K MXU matmuls (K = 6*Cin and 3*Cin) instead of 9 K=Cin ones.
    acc = jnp.dot(a01, w01_ref[...], preferred_element_type=jnp.float32)
    acc = acc + jnp.dot(a2, w2_ref[...], preferred_element_type=jnp.float32)

    y = jnp.maximum(acc + b_ref[...], 0.0)            # fused bias + ReLU (f32)
    o_ref[...] = y.reshape(1, tt * fh, coutp).astype(o_ref.dtype)


def _pick_conv_tile(hout, fh, cin, coutp):
    """Largest row-tile tt that keeps the conv kernel under the VMEM budget."""
    budget = _VMEM_LIMIT - (6 << 20)
    wbytes = 2 * (9 * cin * coutp * 2) + 4 * coutp      # resident weights + bias
    tt = max(1, min(_TT_MAX, hout))
    while True:
        per_row = fh * (2 * (6 * cin * 2)       # xg block, double buffered
                        + 3 * cin * 2           # shifted kw=2 operand
                        + 2 * (coutp * 2)       # out block, double buffered
                        + 2 * (coutp * 4))      # f32 acc / pre-store intermediates
        if wbytes + tt * per_row <= budget or tt == 1:
            return tt
        tt = max(1, tt // 2)


def _phase_conv_layer(h, h_valid, layer, cout):
    """One Cin>1 conv layer.  h: (B, Hp_in, Wp_in, CP_in) bf16 slab."""
    B = h.shape[0]
    hin, win, cin = h_valid
    w01, w2, b = layer["w01"], layer["w2"], layer["b"]
    coutp = w01.shape[1]
    assert w01.shape[0] == 6 * cin and w2.shape[0] == 3 * cin

    hout, wout = _conv_out(hin), _conv_out(win)
    fh = _slab_width(wout)

    hv = h[:, :hin, :win, :cin]                        # valid region of the slab

    # Row-group / parity-phase decomposition, stacked on the channel axis
    # (layout-only glue, ~1.5x the activation bytes).  Channel block (q, kh):
    #   xg[b, i, p, (q*3+kh)*Cin + c] = hv[b, 2i+kh, 2p+q, c]
    cols = []
    for q in range(2):
        for kh in range(3):
            g = jax.lax.slice(hv, (0, kh, q, 0),
                              (B, kh + 2 * hout - 1, win, cin), (1, 2, 2, 1))
            nph = g.shape[2]
            if nph < fh:
                g = jnp.pad(g, ((0, 0), (0, 0), (0, fh - nph), (0, 0)))
            else:
                g = g[:, :, :fh, :]
            cols.append(g)
    xg = jnp.concatenate(cols, axis=-1)                # (B, Hout, Fh, 6*Cin)

    tt = _pick_conv_tile(hout, fh, cin, coutp)
    hp = _round_up(hout, tt)
    if hp > hout:
        xg = jnp.pad(xg, ((0, 0), (0, hp - hout), (0, 0), (0, 0)))

    out = pl.pallas_call(
        _conv3x3_s2_kernel,
        out_shape=jax.ShapeDtypeStruct((B, hp * fh, coutp), jnp.bfloat16),
        grid=(B, hp // tt),
        in_specs=[
            pl.BlockSpec((1, tt, fh, 6 * cin), lambda bi, ti: (bi, ti, 0, 0)),
            pl.BlockSpec((6 * cin, coutp), lambda bi, ti: (0, 0)),   # resident
            pl.BlockSpec((3 * cin, coutp), lambda bi, ti: (0, 0)),   # resident
            pl.BlockSpec((1, coutp), lambda bi, ti: (0, 0)),         # resident
        ],
        out_specs=pl.BlockSpec((1, tt * fh, coutp), lambda bi, ti: (bi, ti, 0)),
        compiler_params=pltpu.CompilerParams(
            dimension_semantics=("parallel", "parallel"),
            vmem_limit_bytes=_VMEM_LIMIT),
        cost_estimate=pl.CostEstimate(
            flops=int(2 * 9 * cin * coutp * B * hp * fh),
            transcendentals=0,
            bytes_accessed=int(xg.size * 2 + 9 * cin * coutp * 2 + 4 * coutp
                               + B * hp * fh * coutp * 2)),
    )(xg, w01, w2, b)

    h_out = out.reshape(B, hp, fh, coutp)              # free row-major reshape
    return h_out, (hout, wout, cout)


# ---------------------------------------------------------------------------
# Pallas kernel 2: tiled  (M,K) @ (K,N) + bias  [+ ReLU]  with K reduction axis
# ---------------------------------------------------------------------------
def _matmul_bias_act_kernel(x_ref, w_ref, b_ref, o_ref, acc_ref, *, apply_relu):
    k = pl.program_id(1)

    @pl.when(k == 0)
    def _init():
        acc_ref[...] = jnp.zeros_like(acc_ref)

    acc_ref[...] += jnp.dot(x_ref[...], w_ref[...],
                            preferred_element_type=jnp.float32)

    @pl.when(k == pl.num_programs(1) - 1)
    def _finalize():
        y = acc_ref[...] + b_ref[...]
        if apply_relu:
            y = jnp.maximum(y, 0.0)
        o_ref[...] = y.astype(o_ref.dtype)


def fused_matmul(x, w, b, *, relu, out_dtype, n_out=None):
    """y = x @ w + b (optional ReLU).

    `w` / `b` are prepared at init: w is (Kp, Np) bf16 with Np % 128 == 0 and
    Kp either == K or a multiple of _TK_MAX (zero rows past K); b is (1, Np) f32.
    """
    M, K = x.shape
    Kp, Np = w.shape
    assert Kp >= K and Np % 128 == 0, (Kp, K, Np)

    tk = Kp if Kp <= _TK_MAX else _TK_MAX              # keep K resident if it fits
    assert Kp % tk == 0

    tm = min(_TM_MAX, _round_up(M, 16))
    if tm >= 32 and _round_up(M, tm) // tm < 2:        # >=2 M blocks (v7x megacore)
        tm = _round_up(tm // 2, 16)
    Mp = _round_up(M, tm)

    xb = x.astype(jnp.bfloat16)
    if Mp > M or Kp > K:
        xb = jnp.pad(xb, ((0, Mp - M), (0, Kp - K)))

    out = pl.pallas_call(
        functools.partial(_matmul_bias_act_kernel, apply_relu=relu),
        out_shape=jax.ShapeDtypeStruct((Mp, Np), out_dtype),
        grid=(Mp // tm, Kp // tk),
        in_specs=[
            pl.BlockSpec((tm, tk), lambda m, k: (m, k)),
            pl.BlockSpec((tk, Np), lambda m, k: (k, 0)),
            pl.BlockSpec((1, Np), lambda m, k: (0, 0)),
        ],
        out_specs=pl.BlockSpec((tm, Np), lambda m, k: (m, 0)),
        scratch_shapes=[pltpu.VMEM((tm, Np), jnp.float32)],
        compiler_params=pltpu.CompilerParams(
            dimension_semantics=("parallel", "arbitrary"),
            vmem_limit_bytes=_VMEM_LIMIT),
        cost_estimate=pl.CostEstimate(
            flops=int(2 * Mp * Kp * Np),
            transcendentals=0,
            bytes_accessed=int(Mp * Kp * 2 + Kp * Np * 2 + 4 * Np
                               + Mp * Np * jnp.dtype(out_dtype).itemsize)),
    )(xb, w, b)

    if Mp > M:
        out = out[:M]
    if n_out is not None and n_out < Np:
        out = out[:, :n_out]
    return out


# ---------------------------------------------------------------------------
# Module: synthetic params (kernel-ready at init) + forward
# ---------------------------------------------------------------------------
def calc_conv_out_dim_per_channel(input_dim, kernel_size, stride, num_layers):
    dim = input_dim
    for _ in range(num_layers):
        dim = (dim - kernel_size) // stride + 1
    return dim


def init_params(key, input_dim, subsampling_factor, d_model):
    assert subsampling_factor in (2, 4, 8)
    num_layers = int(math.log2(subsampling_factor))
    keys = jax.random.split(key, 2 * num_layers + 2)

    coutp = _round_up(d_model, 128)
    raw_conv, layers = [], []
    in_ch, f = 1, input_dim
    for l in range(num_layers):
        w = 0.05 * jax.random.normal(keys[2 * l], (3, 3, in_ch, d_model), jnp.float32)
        b = 0.05 * jax.random.normal(keys[2 * l + 1], (d_model,), jnp.float32)
        raw_conv.append((w, b))
        b_pad = jnp.pad(b, (0, coutp - d_model)).reshape(1, coutp).astype(jnp.float32)
        if l == 0:
            # layer 1 (Cin=1): im2col matmul weight, taps (kh,kw)-major, K padded 9->16
            w_flat = jnp.pad(w.reshape(9, d_model),
                             ((0, 7), (0, coutp - d_model))).astype(jnp.bfloat16)
            layers.append({"w": w_flat, "b": b_pad})
        else:
            # layers >=2: (kw, kh, cin)-major flattened taps, split kw in {0,1} / kw=2
            wt = jnp.transpose(w, (1, 0, 2, 3))                       # (kw, kh, cin, cout)
            wt = jnp.pad(wt, ((0, 0), (0, 0), (0, 0), (0, coutp - d_model)))
            w01 = wt[:2].reshape(6 * in_ch, coutp).astype(jnp.bfloat16)
            w2 = wt[2:].reshape(3 * in_ch, coutp).astype(jnp.bfloat16)
            layers.append({"w01": w01, "w2": w2, "b": b_pad})
        in_ch = d_model
        f = _conv_out(f)

    f_after = f
    lin_in = d_model * f_after
    w_lin = 0.05 * jax.random.normal(keys[-2], (lin_in, d_model), jnp.float32)
    b_lin = 0.05 * jax.random.normal(keys[-1], (d_model,), jnp.float32)

    # Kernel-ready linear weight that consumes the padded (w, c)-flattened conv
    # slab directly (zero rows for padding columns / padded channels), so the
    # conv output needs no slice / re-pad before the linear.
    wpad_last = _slab_width(f_after)
    k_lin = wpad_last * coutp
    wl3 = jnp.zeros((wpad_last, coutp, d_model), jnp.float32)
    wl3 = wl3.at[:f_after, :d_model, :].set(
        w_lin.reshape(d_model, f_after, d_model).transpose(1, 0, 2))
    wl = wl3.reshape(k_lin, d_model)
    n_p = _round_up(d_model, 128)
    k_p = k_lin if k_lin <= _TK_MAX else _round_up(k_lin, _TK_MAX)
    wl = jnp.pad(wl, ((0, k_p - k_lin), (0, n_p - d_model))).astype(jnp.bfloat16)
    bl = jnp.pad(b_lin, (0, n_p - d_model)).reshape(1, n_p).astype(jnp.float32)

    return {
        "conv": layers,
        "linear_w": wl,
        "linear_b": bl,
        # raw f32 params (PyTorch layout) kept for the reference path only
        "raw_conv": raw_conv,
        "raw_linear_w": w_lin,
        "raw_linear_b": b_lin,
    }


def striding_conv_subsampling(params, x, lengths, *, subsampling_factor, d_model):
    """x: (B, T, F) f32; lengths: (B,) int32 -> ((B, T', d_model) f32, (B,) int32)."""
    B, T, F = x.shape
    xb = x.astype(jnp.bfloat16)
    layers = params["conv"]

    # ---- layer 1 (Cin=1): lane-friendly im2col + fused matmul + ReLU ----
    l0 = layers[0]
    coutp = l0["w"].shape[1]
    hout, wout = _conv_out(T), _conv_out(F)
    wpad = _slab_width(wout)
    taps = []
    for kh in range(3):
        for kw in range(3):
            taps.append(jax.lax.slice(xb, (0, kh, kw),
                                      (B, kh + 2 * hout - 1, kw + 2 * wout - 1),
                                      (1, 2, 2)))
    p = jnp.stack(taps, axis=-1)                                 # (B, Hout, Wout, 9)
    p = jnp.pad(p, ((0, 0), (0, 0), (0, wpad - wout), (0, 7)))   # -> (..., Wpad, 16)
    y = fused_matmul(p.reshape(B * hout * wpad, 16), l0["w"], l0["b"],
                     relu=True, out_dtype=jnp.bfloat16)
    h = y.reshape(B, hout, wpad, coutp)                          # lane-dense slab
    h_valid = (hout, wout, d_model)

    # ---- layers >= 2: phase-decomposed direct-conv Pallas kernel ----
    for layer in layers[1:]:
        h, h_valid = _phase_conv_layer(h, h_valid, layer, d_model)

    # ---- final linear: consumes the padded slab directly ----
    _, hp, wp, cp = h.shape
    y = fused_matmul(h.reshape(B * hp, wp * cp), params["linear_w"],
                     params["linear_b"], relu=False, out_dtype=jnp.float32,
                     n_out=d_model)
    y = y.reshape(B, hp, d_model)[:, :h_valid[0], :]

    # trivial per-batch scalar arithmetic, kept in plain JAX
    new_lengths = (lengths - (subsampling_factor - 1)) // subsampling_factor
    new_lengths = jnp.maximum(new_lengths, 1)
    return y, new_lengths


# ---------------------------------------------------------------------------
# Pure-JAX reference (correctness check, HIGHEST precision, PyTorch layout)
# ---------------------------------------------------------------------------
def reference(params, x, lengths, subsampling_factor):
    h = x[:, None, :, :]                               # NCHW
    for (w, b) in params["raw_conv"]:
        h = jax.lax.conv_general_dilated(
            h, w, window_strides=(2, 2), padding="VALID",
            dimension_numbers=("NCHW", "HWIO", "NCHW"),
            precision=jax.lax.Precision.HIGHEST)
        h = jnp.maximum(h + b[None, :, None, None], 0.0)
    B, C, Tp, Fp = h.shape
    h = jnp.transpose(h, (0, 2, 1, 3)).reshape(B, Tp, C * Fp)
    y = jnp.dot(h, params["raw_linear_w"],
                precision=jax.lax.Precision.HIGHEST) + params["raw_linear_b"]
    nl = jnp.maximum((lengths - (subsampling_factor - 1)) // subsampling_factor, 1)
    return y, nl


if __name__ == "__main__":
    key = jax.random.PRNGKey(0)
    B, T, F = 2, 16, 16
    d_model = 32
    subsampling_factor = 4                          # -> 2 conv layers
    kx, kp = jax.random.split(key, 2)

    x = jax.random.normal(kx, (B, T, F), jnp.float32)
    lengths = jnp.array([16, 12], dtype=jnp.int32)
    params = init_params(kp, F, subsampling_factor, d_model)

    fwd = jax.jit(functools.partial(striding_conv_subsampling,
                                    subsampling_factor=subsampling_factor,
                                    d_model=d_model))
    y, new_lengths = fwd(params, x, lengths)
    jax.block_until_ready(y)
    jax.block_until_ready(new_lengths)

    # sanity-check against a pure-JAX reference (bf16 kernels vs f32 HIGHEST ref)
    y_ref, nl_ref = reference(params, x, lengths, subsampling_factor)
    num_layers = int(math.log2(subsampling_factor))
    t_out = calc_conv_out_dim_per_channel(T, 3, 2, num_layers)
    assert y.shape == (B, t_out, d_model), y.shape
    err = float(jnp.max(jnp.abs(y - y_ref)))
    assert jnp.allclose(y, y_ref, atol=2e-2, rtol=2e-2), err
    assert jnp.array_equal(new_lengths, nl_ref), (new_lengths, nl_ref)

    print("KERNEL_OK")
</pallas_src>

<mosaic_0001>
module attributes {stable_mosaic.version = 11 : i64} {
  func.func @_matmul_bias_act_kernel(%arg0: i32, %arg1: i32, %arg2: memref<112x16xbf16, #tpu.memory_space<vmem>>, %arg3: memref<16x128xbf16, #tpu.memory_space<vmem>>, %arg4: memref<1x128xf32, #tpu.memory_space<vmem>>, %arg5: memref<112x128xbf16, #tpu.memory_space<vmem>>, %arg6: memref<112x128xf32, #tpu.memory_space<vmem>>) attributes {dimension_semantics = [#tpu.dimension_semantics<parallel>, #tpu.dimension_semantics<arbitrary>], iteration_bounds = array<i64: 2, 1>, scalar_prefetch = 0 : i64, scratch_operands = 1 : i64, tpu.core_type = #tpu.core_type<tc>, window_params = [{transform_indices = @transform_0, window_bounds = array<i64: 112, 16>}, {transform_indices = @transform_1, window_bounds = array<i64: 16, 128>}, {pipeline_mode = #tpu.pipeline_mode<synchronous>, transform_indices = @transform_2, window_bounds = array<i64: 1, 128>}, {transform_indices = @transform_3, window_bounds = array<i64: 112, 128>}]} {
    %c0_i32 = arith.constant 0 : i32
    %0 = arith.cmpi eq, %arg1, %c0_i32 : i32
    %1 = arith.extui %0 : i1 to i32
    %c0_i32_0 = arith.constant 0 : i32
    %2 = arith.cmpi ne, %1, %c0_i32_0 : i32
    scf.if %2 {
      %cst_10 = arith.constant 0.000000e+00 : f32
      %12 = vector.broadcast %cst_10 : f32 to vector<112x128xf32>
      %c0_11 = arith.constant 0 : index
      %c0_12 = arith.constant 0 : index
      %13 = vector.load %arg6[%c0_11, %c0_12] : memref<112x128xf32, #tpu.memory_space<vmem>>, vector<112x128xf32>
      tpu.vector_store %arg6[%c0_11, %c0_12], %12 {strides = array<i32>} : memref<112x128xf32, #tpu.memory_space<vmem>>, vector<112x128xf32>,
    } else {
    }
    %c0 = arith.constant 0 : index
    %c0_1 = arith.constant 0 : index
    %3 = vector.load %arg6[%c0, %c0_1] : memref<112x128xf32, #tpu.memory_space<vmem>>, vector<112x128xf32>
    %c0_2 = arith.constant 0 : index
    %c0_3 = arith.constant 0 : index
    %4 = vector.load %arg2[%c0_2, %c0_3] : memref<112x16xbf16, #tpu.memory_space<vmem>>, vector<112x16xbf16>
    %c0_4 = arith.constant 0 : index
    %c0_5 = arith.constant 0 : index
    %5 = vector.load %arg3[%c0_4, %c0_5] : memref<16x128xbf16, #tpu.memory_space<vmem>>, vector<16x128xbf16>
    %cst = arith.constant dense<0.000000e+00> : vector<112x128xf32>
    %6 = tpu.matmul %4, %5, %cst {dimension_numbers = #tpu.dot_dimension_numbers<[1], [0], [0], [1], [0, 0, 1, 1], [], []>} : vector<112x16xbf16>, vector<16x128xbf16>, vector<112x128xf32> -> vector<112x128xf32>
    %7 = arith.addf %3, %6 : vector<112x128xf32>
    %c0_6 = arith.constant 0 : index
    %c0_7 = arith.constant 0 : index
    %8 = vector.load %arg6[%c0_6, %c0_7] : memref<112x128xf32, #tpu.memory_space<vmem>>, vector<112x128xf32>
    tpu.vector_store %arg6[%c0_6, %c0_7], %7 {strides = array<i32>} : memref<112x128xf32, #tpu.memory_space<vmem>>, vector<112x128xf32>,
    %c0_i32_8 = arith.constant 0 : i32
    %9 = arith.cmpi eq, %arg1, %c0_i32_8 : i32
    %10 = arith.extui %9 : i1 to i32
    %c0_i32_9 = arith.constant 0 : i32
    %11 = arith.cmpi ne, %10, %c0_i32_9 : i32
    scf.if %11 {
      %c0_10 = arith.constant 0 : index
      %c0_11 = arith.constant 0 : index
      %12 = vector.load %arg6[%c0_10, %c0_11] : memref<112x128xf32, #tpu.memory_space<vmem>>, vector<112x128xf32>
      %c0_12 = arith.constant 0 : index
      %c0_13 = arith.constant 0 : index
      %13 = vector.load %arg4[%c0_12, %c0_13] : memref<1x128xf32, #tpu.memory_space<vmem>>, vector<1x128xf32>
      %14 = vector.broadcast %13 : vector<1x128xf32> to vector<112x128xf32>
      %15 = arith.addf %12, %14 : vector<112x128xf32>
      %cst_14 = arith.constant 0.000000e+00 : f32
      %16 = vector.broadcast %cst_14 : f32 to vector<112x128xf32>
      %17 = arith.maximumf %15, %16 : vector<112x128xf32>
      %18 = arith.truncf %17 : vector<112x128xf32> to vector<112x128xbf16>
      %c0_15 = arith.constant 0 : index
      %c0_16 = arith.constant 0 : index
      %19 = vector.load %arg5[%c0_15, %c0_16] : memref<112x128xbf16, #tpu.memory_space<vmem>>, vector<112x128xbf16>
      tpu.vector_store %arg5[%c0_15, %c0_16], %18 {strides = array<i32>} : memref<112x128xbf16, #tpu.memory_space<vmem>>, vector<112x128xbf16>,
    } else {
    }
    return
  }
  func.func @transform_0(%arg0: i32, %arg1: i32) -> (i32, i32) {
    %c0_i32 = arith.constant 0 : i32
    return %arg0, %arg1 : i32, i32
  }
  func.func @transform_1(%arg0: i32, %arg1: i32) -> (i32, i32) {
    %c0_i32 = arith.constant 0 : i32
    %c0_i32_0 = arith.constant 0 : i32
    return %arg1, %c0_i32 : i32, i32
  }
  func.func @transform_2(%arg0: i32, %arg1: i32) -> (i32, i32) {
    %c0_i32 = arith.constant 0 : i32
    %c0_i32_0 = arith.constant 0 : i32
    %c0_i32_1 = arith.constant 0 : i32
    return %c0_i32, %c0_i32_0 : i32, i32
  }
  func.func @transform_3(%arg0: i32, %arg1: i32) -> (i32, i32) {
    %c0_i32 = arith.constant 0 : i32
    %c0_i32_0 = arith.constant 0 : i32
    return %arg0, %c0_i32 : i32, i32
  }
}

module attributes {stable_mosaic.version = 11 : i64} {
  func.func @_conv3x3_s2_kernel(%arg0: i32, %arg1: i32, %arg2: memref<1x3x16x192xbf16, #tpu.memory_space<vmem>>, %arg3: memref<192x128xbf16, #tpu.memory_space<vmem>>, %arg4: memref<96x128xbf16, #tpu.memory_space<vmem>>, %arg5: memref<1x128xf32, #tpu.memory_space<vmem>>, %arg6: memref<1x48x128xbf16, #tpu.memory_space<vmem>>) attributes {dimension_semantics = [#tpu.dimension_semantics<parallel>, #tpu.dimension_semantics<parallel>], iteration_bounds = array<i64: 2, 1>, scalar_prefetch = 0 : i64, scratch_operands = 0 : i64, tpu.core_type = #tpu.core_type<tc>, window_params = [{transform_indices = @transform_0, window_bounds = array<i64: 1, 3, 16, 192>}, {pipeline_mode = #tpu.pipeline_mode<synchronous>, transform_indices = @transform_1, window_bounds = array<i64: 192, 128>}, {pipeline_mode = #tpu.pipeline_mode<synchronous>, transform_indices = @transform_2, window_bounds = array<i64: 96, 128>}, {pipeline_mode = #tpu.pipeline_mode<synchronous>, transform_indices = @transform_3, window_bounds = array<i64: 1, 128>}, {transform_indices = @transform_4, window_bounds = array<i64: 1, 48, 128>}]} {
    %c0 = arith.constant 0 : index
    %c0_0 = arith.constant 0 : index
    %c0_1 = arith.constant 0 : index
    %c0_2 = arith.constant 0 : index
    %0 = vector.load %arg2[%c0, %c0_0, %c0_1, %c0_2] : memref<1x3x16x192xbf16, #tpu.memory_space<vmem>>, vector<1x3x16x192xbf16>
    %1 = vector.shape_cast %0 : vector<1x3x16x192xbf16> to vector<3x16x192xbf16>
    %2 = vector.shape_cast %1 : vector<3x16x192xbf16> to vector<48x192xbf16>
    %3 = vector.extract_strided_slice %1 {offsets = [0, 0, 0], sizes = [3, 16, 96], strides = [1, 1, 1]} : vector<3x16x192xbf16> to vector<3x16x96xbf16>
    %4 = vector.extract_strided_slice %3 {offsets = [0, 1, 0], sizes = [3, 15, 96], strides = [1, 1, 1]} : vector<3x16x96xbf16> to vector<3x15x96xbf16>
    %5 = vector.extract_strided_slice %3 {offsets = [0, 0, 0], sizes = [3, 1, 96], strides = [1, 1, 1]} : vector<3x16x96xbf16> to vector<3x1x96xbf16>
    %6 = tpu.concatenate %4, %5 in 1 : vector<3x15x96xbf16>, vector<3x1x96xbf16> -> vector<3x16x96xbf16>
    %7 = vector.shape_cast %6 : vector<3x16x96xbf16> to vector<48x96xbf16>
    %c0_3 = arith.constant 0 : index
    %c0_4 = arith.constant 0 : index
    %8 = vector.load %arg3[%c0_3, %c0_4] : memref<192x128xbf16, #tpu.memory_space<vmem>>, vector<192x128xbf16>
    %cst = arith.constant dense<0.000000e+00> : vector<48x128xf32>
    %9 = tpu.matmul %2, %8, %cst {dimension_numbers = #tpu.dot_dimension_numbers<[1], [0], [0], [1], [0, 0, 1, 1], [], []>} : vector<48x192xbf16>, vector<192x128xbf16>, vector<48x128xf32> -> vector<48x128xf32>
    %c0_5 = arith.constant 0 : index
    %c0_6 = arith.constant 0 : index
    %10 = vector.load %arg4[%c0_5, %c0_6] : memref<96x128xbf16, #tpu.memory_space<vmem>>, vector<96x128xbf16>
    %cst_7 = arith.constant dense<0.000000e+00> : vector<48x128xf32>
    %11 = tpu.matmul %7, %10, %cst_7 {dimension_numbers = #tpu.dot_dimension_numbers<[1], [0], [0], [1], [0, 0, 1, 1], [], []>} : vector<48x96xbf16>, vector<96x128xbf16>, vector<48x128xf32> -> vector<48x128xf32>
    %12 = arith.addf %9, %11 : vector<48x128xf32>
    %c0_8 = arith.constant 0 : index
    %c0_9 = arith.constant 0 : index
    %13 = vector.load %arg5[%c0_8, %c0_9] : memref<1x128xf32, #tpu.memory_space<vmem>>, vector<1x128xf32>
    %14 = vector.broadcast %13 : vector<1x128xf32> to vector<48x128xf32>
    %15 = arith.addf %12, %14 : vector<48x128xf32>
    %cst_10 = arith.constant 0.000000e+00 : f32
    %16 = vector.broadcast %cst_10 : f32 to vector<48x128xf32>
    %17 = arith.maximumf %15, %16 : vector<48x128xf32>
    %18 = vector.shape_cast %17 : vector<48x128xf32> to vector<1x48x128xf32>
    %19 = arith.truncf %18 : vector<1x48x128xf32> to vector<1x48x128xbf16>
    %c0_11 = arith.constant 0 : index
    %c0_12 = arith.constant 0 : index
    %c0_13 = arith.constant 0 : index
    %20 = vector.load %arg6[%c0_11, %c0_12, %c0_13] : memref<1x48x128xbf16, #tpu.memory_space<vmem>>, vector<1x48x128xbf16>
    tpu.vector_store %arg6[%c0_11, %c0_12, %c0_13], %19 {strides = array<i32>} : memref<1x48x128xbf16, #tpu.memory_space<vmem>>, vector<1x48x128xbf16>,
    return
  }
  func.func @transform_0(%arg0: i32, %arg1: i32) -> (i32, i32, i32, i32) {
    %c0_i32 = arith.constant 0 : i32
    %c0_i32_0 = arith.constant 0 : i32
    %c0_i32_1 = arith.constant 0 : i32
    return %arg0, %arg1, %c0_i32, %c0_i32_0 : i32, i32, i32, i32
  }
  func.func @transform_1(%arg0: i32, %arg1: i32) -> (i32, i32) {
    %c0_i32 = arith.constant 0 : i32
    %c0_i32_0 = arith.constant 0 : i32
    %c0_i32_1 = arith.constant 0 : i32
    return %c0_i32, %c0_i32_0 : i32, i32
  }
  func.func @transform_2(%arg0: i32, %arg1: i32) -> (i32, i32) {
    %c0_i32 = arith.constant 0 : i32
    %c0_i32_0 = arith.constant 0 : i32
    %c0_i32_1 = arith.constant 0 : i32
    return %c0_i32, %c0_i32_0 : i32, i32
  }
  func.func @transform_3(%arg0: i32, %arg1: i32) -> (i32, i32) {
    %c0_i32 = arith.constant 0 : i32
    %c0_i32_0 = arith.constant 0 : i32
    %c0_i32_1 = arith.constant 0 : i32
    return %c0_i32, %c0_i32_0 : i32, i32
  }
  func.func @transform_4(%arg0: i32, %arg1: i32) -> (i32, i32, i32) {
    %c0_i32 = arith.constant 0 : i32
    %c0_i32_0 = arith.constant 0 : i32
    return %arg0, %arg1, %c0_i32 : i32, i32, i32
  }
}

module attributes {stable_mosaic.version = 11 : i64} {
  func.func @_matmul_bias_act_kernel(%arg0: i32, %arg1: i32, %arg2: memref<16x2048xbf16, #tpu.memory_space<vmem>>, %arg3: memref<2048x128xbf16, #tpu.memory_space<vmem>>, %arg4: memref<1x128xf32, #tpu.memory_space<vmem>>, %arg5: memref<16x128xf32, #tpu.memory_space<vmem>>, %arg6: memref<16x128xf32, #tpu.memory_space<vmem>>) attributes {dimension_semantics = [#tpu.dimension_semantics<parallel>, #tpu.dimension_semantics<arbitrary>], iteration_bounds = array<i64: 1, 1>, scalar_prefetch = 0 : i64, scratch_operands = 1 : i64, tpu.core_type = #tpu.core_type<tc>, window_params = [{transform_indices = @transform_0, window_bounds = array<i64: 16, 2048>}, {transform_indices = @transform_1, window_bounds = array<i64: 2048, 128>}, {pipeline_mode = #tpu.pipeline_mode<synchronous>, transform_indices = @transform_2, window_bounds = array<i64: 1, 128>}, {transform_indices = @transform_3, window_bounds = array<i64: 16, 128>}]} {
    %c0_i32 = arith.constant 0 : i32
    %0 = arith.cmpi eq, %arg1, %c0_i32 : i32
    %1 = arith.extui %0 : i1 to i32
    %c0_i32_0 = arith.constant 0 : i32
    %2 = arith.cmpi ne, %1, %c0_i32_0 : i32
    scf.if %2 {
      %cst_10 = arith.constant 0.000000e+00 : f32
      %12 = vector.broadcast %cst_10 : f32 to vector<16x128xf32>
      %c0_11 = arith.constant 0 : index
      %c0_12 = arith.constant 0 : index
      %13 = vector.load %arg6[%c0_11, %c0_12] : memref<16x128xf32, #tpu.memory_space<vmem>>, vector<16x128xf32>
      tpu.vector_store %arg6[%c0_11, %c0_12], %12 {strides = array<i32>} : memref<16x128xf32, #tpu.memory_space<vmem>>, vector<16x128xf32>,
    } else {
    }
    %c0 = arith.constant 0 : index
    %c0_1 = arith.constant 0 : index
    %3 = vector.load %arg6[%c0, %c0_1] : memref<16x128xf32, #tpu.memory_space<vmem>>, vector<16x128xf32>
    %c0_2 = arith.constant 0 : index
    %c0_3 = arith.constant 0 : index
    %4 = vector.load %arg2[%c0_2, %c0_3] : memref<16x2048xbf16, #tpu.memory_space<vmem>>, vector<16x2048xbf16>
    %c0_4 = arith.constant 0 : index
    %c0_5 = arith.constant 0 : index
    %5 = vector.load %arg3[%c0_4, %c0_5] : memref<2048x128xbf16, #tpu.memory_space<vmem>>, vector<2048x128xbf16>
    %cst = arith.constant dense<0.000000e+00> : vector<16x128xf32>
    %6 = tpu.matmul %4, %5, %cst {dimension_numbers = #tpu.dot_dimension_numbers<[1], [0], [0], [1], [0, 0, 1, 1], [], []>} : vector<16x2048xbf16>, vector<2048x128xbf16>, vector<16x128xf32> -> vector<16x128xf32>
    %7 = arith.addf %3, %6 : vector<16x128xf32>
    %c0_6 = arith.constant 0 : index
    %c0_7 = arith.constant 0 : index
    %8 = vector.load %arg6[%c0_6, %c0_7] : memref<16x128xf32, #tpu.memory_space<vmem>>, vector<16x128xf32>
    tpu.vector_store %arg6[%c0_6, %c0_7], %7 {strides = array<i32>} : memref<16x128xf32, #tpu.memory_space<vmem>>, vector<16x128xf32>,
    %c0_i32_8 = arith.constant 0 : i32
    %9 = arith.cmpi eq, %arg1, %c0_i32_8 : i32
    %10 = arith.extui %9 : i1 to i32
    %c0_i32_9 = arith.constant 0 : i32
    %11 = arith.cmpi ne, %10, %c0_i32_9 : i32
    scf.if %11 {
      %c0_10 = arith.constant 0 : index
      %c0_11 = arith.constant 0 : index
      %12 = vector.load %arg6[%c0_10, %c0_11] : memref<16x128xf32, #tpu.memory_space<vmem>>, vector<16x128xf32>
      %c0_12 = arith.constant 0 : index
      %c0_13 = arith.constant 0 : index
      %13 = vector.load %arg4[%c0_12, %c0_13] : memref<1x128xf32, #tpu.memory_space<vmem>>, vector<1x128xf32>
      %14 = vector.broadcast %13 : vector<1x128xf32> to vector<16x128xf32>
      %15 = arith.addf %12, %14 : vector<16x128xf32>
      %c0_14 = arith.constant 0 : index
      %c0_15 = arith.constant 0 : index
      %16 = vector.load %arg5[%c0_14, %c0_15] : memref<16x128xf32, #tpu.memory_space<vmem>>, vector<16x128xf32>
      tpu.vector_store %arg5[%c0_14, %c0_15], %15 {strides = array<i32>} : memref<16x128xf32, #tpu.memory_space<vmem>>, vector<16x128xf32>,
    } else {
    }
    return
  }
  func.func @transform_0(%arg0: i32, %arg1: i32) -> (i32, i32) {
    %c0_i32 = arith.constant 0 : i32
    return %arg0, %arg1 : i32, i32
  }
  func.func @transform_1(%arg0: i32, %arg1: i32) -> (i32, i32) {
    %c0_i32 = arith.constant 0 : i32
    %c0_i32_0 = arith.constant 0 : i32
    return %arg1, %c0_i32 : i32, i32
  }
  func.func @transform_2(%arg0: i32, %arg1: i32) -> (i32, i32) {
    %c0_i32 = arith.constant 0 : i32
    %c0_i32_0 = arith.constant 0 : i32
    %c0_i32_1 = arith.constant 0 : i32
    return %c0_i32, %c0_i32_0 : i32, i32
  }
  func.func @transform_3(%arg0: i32, %arg1: i32) -> (i32, i32) {
    %c0_i32 = arith.constant 0 : i32
    %c0_i32_0 = arith.constant 0 : i32
    return %arg0, %c0_i32 : i32, i32
  }
}

</mosaic_0001>

<llo_original>
// kernel: striding_conv_subsampling.3
$region0: #{striding_conv_subsampling.3}
  #allocation0 [shape = 'u32[]', space=smem, size = 0x4, offset = 0x4, fixed_abs, tag = 'smem constant byte address 0x4 - core index']
  #allocation1 [shape = 'u32[144,128]{1,0:T(1,128)}', space=vmem, size = 0x12000, scoped, tag = 'internal scratch']
  #allocation2 [shape = 'f32[112,128]{1,0:T(8,128)}', space=vmem, size = 0xe000, scoped, tag = 'scratch operand']
  %s0 = inlined_call_operand.vmem [shape: bf16[224,16], index: 0, kind: input, shape index: {}]
  %s1 = inlined_call_operand.vmem [shape: bf16[16,128], index: 1, kind: input, shape index: {}]
  %s2 = inlined_call_operand.vmem [shape: f32[1,128], index: 2, kind: input, shape index: {}]
  %s3 = inlined_call_operand.vmem [shape: bf16[224,128], index: 3, kind: output, shape index: {}]
  %s4 = sld [smem:[#allocation0]]
  $region53: #{striding_conv_subsampling.3} parent=0
    _
  %s6 = ssub.s32 1, %s4
  %s7 = scalar_select 0, %s6, %s4
  loop: start=0, step=1, limit=4
  $region2: #{striding_conv_subsampling.3} parent=0 // loop_pre_header
    _
  $region3: #{striding_conv_subsampling.3} parent=0 // loop_header
    %s9 = sphi 0, %s13
    %p10 = scmp.ge.s32.totalorder %s9, 4
    %s16 = sphi 0, %s28
    %s17 = sphi 0, %s24
    %s18 = sphi 0, %s16
    %s19 = sphi 0, %s17
    %s20 = sphi 0, %s18
    %s21 = sphi 0, %s19
    %s33 = sphi 0, %s35
    %s36 = sphi 0, %s33
    %s37 = sphi 0, %s36
    %s53 = sphi 0, %s37
    %s59 = sphi 0, %s61
    %s62 = sphi 0, %s59
    %s63 = sphi 0, %s62
    %s79 = sphi 0, %s63
    %s83 = sphi 0, %s83
    %s85 = sphi 0, %s83
    %s86 = sphi 0, %s85
    %s100 = sphi 0, %s86
    %s106 = sphi 0, %s108
    %s109 = sphi 0, %s106
    %s110 = sphi 0, %s109
    %s126 = sphi 0, %s110
  $region4: #{striding_conv_subsampling.3} parent=0 // loop_header_branch
    %12 = sbr.rel (%p10) target = $region8
  $region5: #{striding_conv_subsampling.3} parent=0 // loop_body
    %s14 = ssub.s32 %s9, 1
    %s15 = ssub.s32 %s9, 2
    %s22 = sadd.s32 1, %s17
    %p23 = scmp.ge.s32.totalorder %s22, 1
    %s24 = scalar_select %p23, 0, %s22
    %s25 = sadd.s32 1, %s16
    %s26 = scalar_select %p23, %s25, %s16
    %p27 = scmp.ge.s32.totalorder %s26, 2
    %s28 = scalar_select %p27, 0, %s26
    %s29 = ssub.s32 %s16, %s28
    %s30 = ssub.s32 %s17, %s24
    %s31 = sor.u32 %s29, %s30
    %p32 = scmp.eq.s32.totalorder %s31, 0
    %s34 = sadd.s32 %s33, 1
    %s35 = scalar_select %p32, %s33, %s34
    %p38 = pneg %p32
    %p39 = scmp.eq.s32.totalorder %s9, 1
    %p40 = por %p38, %p39
    %p41 = scmp.ne.s32.totalorder %s33, %s36
    %p42 = scmp.eq.s32.totalorder %s9, 0
    %p43 = por %p41, %p42
    %p44 = scmp.ne.s32.totalorder %s33, %s36
    %p45 = scmp.eq.s32.totalorder %s14, 1
    %p46 = por %p44, %p45
    %p47 = scmp.ne.s32.totalorder %s36, %s37
    %p48 = scmp.eq.s32.totalorder %s14, 0
    %p49 = por %p47, %p48
    %p50 = scmp.ne.s32.totalorder %s36, %s37
    %p51 = scmp.eq.s32.totalorder %s15, 1
    %p52 = por %p50, %p51
    %p54 = scmp.ne.s32.totalorder %s37, %s53
    %p55 = scmp.eq.s32.totalorder %s15, 0
    %p56 = por %p54, %p55
    %s57 = ssub.s32 %s17, %s24
    %p58 = scmp.eq.s32.totalorder %s57, 0
    %s60 = sadd.s32 %s59, 1
    %s61 = scalar_select %p58, %s59, %s60
    %p64 = pneg %p58
    %p65 = scmp.eq.s32.totalorder %s9, 1
    %p66 = por %p64, %p65
    %p67 = scmp.ne.s32.totalorder %s59, %s62
    %p68 = scmp.eq.s32.totalorder %s9, 0
    %p69 = por %p67, %p68
    %p70 = scmp.ne.s32.totalorder %s59, %s62
    %p71 = scmp.eq.s32.totalorder %s14, 1
    %p72 = por %p70, %p71
    %p73 = scmp.ne.s32.totalorder %s62, %s63
    %p74 = scmp.eq.s32.totalorder %s14, 0
    %p75 = por %p73, %p74
    %p76 = scmp.ne.s32.totalorder %s62, %s63
    %p77 = scmp.eq.s32.totalorder %s15, 1
    %p78 = por %p76, %p77
    %p80 = scmp.ne.s32.totalorder %s63, %s79
    %p81 = scmp.eq.s32.totalorder %s15, 0
    %p82 = por %p80, %p81
    %s84 = sadd.s32 %s83, 1
    %p87 = scmp.eq.s32.totalorder %s9, 1
    %p88 = scmp.ne.s32.totalorder %s83, %s85
    %p89 = scmp.eq.s32.totalorder %s9, 0
    %p90 = por %p88, %p89
    %p91 = scmp.ne.s32.totalorder %s83, %s85
    %p92 = scmp.eq.s32.totalorder %s14, 1
    %p93 = por %p91, %p92
    %p94 = scmp.ne.s32.totalorder %s85, %s86
    %p95 = scmp.eq.s32.totalorder %s14, 0
    %p96 = por %p94, %p95
    %p97 = scmp.ne.s32.totalorder %s85, %s86
    %p98 = scmp.eq.s32.totalorder %s15, 1
    %p99 = por %p97, %p98
    %p101 = scmp.ne.s32.totalorder %s86, %s100
    %p102 = scmp.eq.s32.totalorder %s15, 0
    %p103 = por %p101, %p102
    %s104 = ssub.s32 %s16, %s28
    %p105 = scmp.eq.s32.totalorder %s104, 0
    %s107 = sadd.s32 %s106, 1
    %s108 = scalar_select %p105, %s106, %s107
    %p111 = pneg %p105
    %p112 = scmp.eq.s32.totalorder %s9, 1
    %p113 = por %p111, %p112
    %p114 = scmp.ne.s32.totalorder %s106, %s109
    %p115 = scmp.eq.s32.totalorder %s9, 0
    %p116 = por %p114, %p115
    %p117 = scmp.ne.s32.totalorder %s106, %s109
    %p118 = scmp.eq.s32.totalorder %s14, 1
    %p119 = por %p117, %p118
    %p120 = scmp.ne.s32.totalorder %s109, %s110
    %p121 = scmp.eq.s32.totalorder %s14, 0
    %p122 = por %p120, %p121
    %p123 = scmp.ne.s32.totalorder %s109, %s110
    %p124 = scmp.eq.s32.totalorder %s15, 1
    %p125 = por %p123, %p124
    %p127 = scmp.ne.s32.totalorder %s110, %s126
    %p128 = scmp.eq.s32.totalorder %s15, 0
    %p129 = por %p127, %p128
    %p130 = scmp.le.s32.totalorder 1, %s9
    %p131 = scmp.lt.s32.totalorder %s9, 3
    %p132 = pnand %p130, %p131
    %p133 = pneg %p132
    // Predicated region
    $region9: #{striding_conv_subsampling.3} parent=5 // pred_check
      _
    $region10: #{striding_conv_subsampling.3} parent=5 // pred_check_branch
      %135 = sbr.rel (%p132) target = $region12
    $region11: #{striding_conv_subsampling.3} parent=5 // pred_region
      %s136 = ssub.s32 %s9, 1
      // Predicated region
      $region13: #{striding_conv_subsampling.3} parent=11 // pred_check
        %p137 = pneg %p75
      $region14: #{striding_conv_subsampling.3} parent=11 // pred_check_branch
        %139 = sbr.rel (%p137) target = $region16
      $region15: #{striding_conv_subsampling.3} parent=11 // pred_region
        %s140 = smul.u32 2, %s19
        %p141 = scmp.lt.s32.totalorder %s140, 1
        %s142 = scalar_select %p141, %s140, 1
        %s143 = smul.addr %s142, 4
        %s144 = scalar_lea.vmem %s1, %s143
        %s145 = smul.u32 2, %s19
      $region16: #{striding_conv_subsampling.3} parent=11 // pred_fallthru
        _
      // Predicated region
      $region17: #{striding_conv_subsampling.3} parent=11 // pred_check
        %p146 = pneg %p96
      $region18: #{striding_conv_subsampling.3} parent=11 // pred_check_branch
        %148 = sbr.rel (%p146) target = $region20
      $region19: #{striding_conv_subsampling.3} parent=11 // pred_region
        _
      $region20: #{striding_conv_subsampling.3} parent=11 // pred_fallthru
        _
    $region12: #{striding_conv_subsampling.3} parent=5 // pred_fallthru
      _
    %p149 = scmp.lt.s32.totalorder %s9, 2
    // Predicated region
    $region21: #{striding_conv_subsampling.3} parent=5 // pred_check
      %p150 = pneg %p149
    $region22: #{striding_conv_subsampling.3} parent=5 // pred_check_branch
      %152 = sbr.rel (%p150) target = $region24
    $region23: #{striding_conv_subsampling.3} parent=5 // pred_region
      // Predicated region
      $region25: #{striding_conv_subsampling.3} parent=23 // pred_check
        %p153 = pneg %p43
      $region26: #{striding_conv_subsampling.3} parent=23 // pred_check_branch
        %155 = sbr.rel (%p153) target = $region28
      $region27: #{striding_conv_subsampling.3} parent=23 // pred_region
        %s156 = smul.u32 14, %s16
        %p157 = scmp.lt.s32.totalorder %s156, 27
        %s158 = scalar_select %p157, %s156, 27
        %p159 = scmp.lt.s32.totalorder %s17, 0
        %s160 = scalar_select %p159, %s17, 0
        %s161 = sadd.s32 %s160, %s158
        %s162 = smul.addr %s161, 4
        %s163 = scalar_lea.vmem %s0, %s162
        %s164 = smul.u32 14, %s16
      $region28: #{striding_conv_subsampling.3} parent=23 // pred_fallthru
        _
    $region24: #{striding_conv_subsampling.3} parent=5 // pred_fallthru
      _
    %p165 = scmp.le.s32.totalorder 1, %s9
    %p166 = scmp.lt.s32.totalorder %s9, 3
    %p167 = pnand %p165, %p166
    %p168 = pneg %p167
    // Predicated region
    $region29: #{striding_conv_subsampling.3} parent=5 // pred_check
      _
    $region30: #{striding_conv_subsampling.3} parent=5 // pred_check_branch
      %170 = sbr.rel (%p167) target = $region32
    $region31: #{striding_conv_subsampling.3} parent=5 // pred_region
      %s171 = ssub.s32 %s9, 1
      %s172 = smul.u32 14, %s18
      %p173 = scmp.lt.s32.totalorder %s172, 27
      %s174 = scalar_select %p173, %s172, 27
      %p175 = scmp.lt.s32.totalorder %s19, 0
      %s176 = scalar_select %p175, %s19, 0
      %s177 = sadd.s32 %s176, %s174
      %s178 = smul.addr %s177, 4
      %s179 = scalar_lea.vmem %s0, %s178
      %p180 = pneg %p49
      %p181 = pneg %p46
      %s182 = smul.u32 2, %s19
      %p183 = scmp.lt.s32.totalorder %s182, 1
      %s184 = scalar_select %p183, %s182, 1
      %s185 = smul.addr %s184, 4
      %s186 = scalar_lea.vmem %s1, %s185
      %p187 = pneg %p75
      %p188 = pneg %p72
      %p189 = pneg %p96
      %p190 = pneg %p93
      %p191 = pneg %p122
      %p192 = pneg %p119
      %s193 = smul.u32 14, %s18
      %p194 = scmp.lt.s32.totalorder %s193, 27
      %s195 = scalar_select %p194, %s193, 27
      %s196 = smul.addr %s195, 4
      %s197 = scalar_lea.vmem %s3, %s196
      %s198 = smul.u32 14, %s18
      %p199 = scmp.lt.s32.totalorder %s198, 27
      %s200 = scalar_select %p199, %s198, 27
      %p201 = scmp.lt.s32.totalorder %s19, 0
      %s202 = scalar_select %p201, %s19, 0
      %s203 = sadd.s32 %s202, %s200
      %s204 = smul.addr %s203, 4
      %s205 = scalar_lea.vmem %s0, %s204
      %s206 = smul.u32 14, %s18
      %s207 = smul.u32 2, %s19
      %p208 = scmp.lt.s32.totalorder %s207, 1
      %s209 = scalar_select %p208, %s207, 1
      %s210 = smul.addr %s209, 4
      %s211 = scalar_lea.vmem %s1, %s210
      %s212 = smul.u32 2, %s19
      %s213 = smul.u32 14, %s18
      %p214 = scmp.lt.s32.totalorder %s213, 27
      %s215 = scalar_select %p214, %s213, 27
      %s216 = smul.addr %s215, 4
      %s217 = scalar_lea.vmem %s3, %s216
      %s218 = smul.u32 14, %s18
      %p220 = scmp.eq.s32.totalorder %s19, 0
      // Predicated region
      $region33: #{striding_conv_subsampling.3} parent=31 // pred_check
        %p221 = pneg %p220
      $region34: #{striding_conv_subsampling.3} parent=31 // pred_check_branch
        %223 = sbr.rel (%p221) target = $region36
      $region35: #{striding_conv_subsampling.3} parent=31 // pred_region
        %224 = vst [vmem:[#allocation2] sm:$0xff] 0.0
        %225 = vst [vmem:[#allocation2 + $0x8] sm:$0xff] 0.0
        %226 = vst [vmem:[#allocation2 + $0x10] sm:$0xff] 0.0
        %227 = vst [vmem:[#allocation2 + $0x18] sm:$0xff] 0.0
        %228 = vst [vmem:[#allocation2 + $0x20] sm:$0xff] 0.0
        %229 = vst [vmem:[#allocation2 + $0x28] sm:$0xff] 0.0
        %230 = vst [vmem:[#allocation2 + $0x30] sm:$0xff] 0.0
        %231 = vst [vmem:[#allocation2 + $0x38] sm:$0xff] 0.0
        %232 = vst [vmem:[#allocation2 + $0x40] sm:$0xff] 0.0
        %233 = vst [vmem:[#allocation2 + $0x48] sm:$0xff] 0.0
        %234 = vst [vmem:[#allocation2 + $0x50] sm:$0xff] 0.0
        %235 = vst [vmem:[#allocation2 + $0x58] sm:$0xff] 0.0
        %236 = vst [vmem:[#allocation2 + $0x60] sm:$0xff] 0.0
        %237 = vst [vmem:[#allocation2 + $0x68] sm:$0xff] 0.0
      $region36: #{striding_conv_subsampling.3} parent=31 // pred_fallthru
        _
      %v238 = vld [vmem:[#allocation2] sm:$0xff]
      %v239 = vld [vmem:[#allocation2 + $0x8] sm:$0xff]
      %v240 = vld [vmem:[#allocation2 + $0x10] sm:$0xff]
      %v241 = vld [vmem:[#allocation2 + $0x18] sm:$0xff]
      %v242 = vld [vmem:[#allocation2 + $0x20] sm:$0xff]
      %v243 = vld [vmem:[#allocation2 + $0x28] sm:$0xff]
      %v244 = vld [vmem:[#allocation2 + $0x30] sm:$0xff]
      %v245 = vld [vmem:[#allocation2 + $0x38] sm:$0xff]
      %v246 = vld [vmem:[#allocation2 + $0x40] sm:$0xff]
      %v247 = vld [vmem:[#allocation2 + $0x48] sm:$0xff]
      %v248 = vld [vmem:[#allocation2 + $0x50] sm:$0xff]
      %v249 = vld [vmem:[#allocation2 + $0x58] sm:$0xff]
      %v250 = vld [vmem:[#allocation2 + $0x60] sm:$0xff]
      %v251 = vld [vmem:[#allocation2 + $0x68] sm:$0xff]
      %v252 = vld [vmem:[%s205] sm:$0xf]
      %v253 = vld [vmem:[%s205 + $0x4] sm:$0xf]
      %v254 = vld [vmem:[%s205 + $0x8] sm:$0xf]
      %v255 = vld [vmem:[%s205 + $0xc] sm:$0xf]
      %v256 = vld [vmem:[%s205 + $0x10] sm:$0xf]
      %v257 = vld [vmem:[%s205 + $0x14] sm:$0xf]
      %v258 = vld [vmem:[%s205 + $0x18] sm:$0xf]
      %v259 = vld [vmem:[%s205 + $0x1c] sm:$0xf]
      %v260 = vld [vmem:[%s205 + $0x20] sm:$0xf]
      %v261 = vld [vmem:[%s205 + $0x24] sm:$0xf]
      %v262 = vld [vmem:[%s205 + $0x28] sm:$0xf]
      %v263 = vld [vmem:[%s205 + $0x2c] sm:$0xf]
      %v264 = vld [vmem:[%s205 + $0x30] sm:$0xf]
      %v265 = vld [vmem:[%s205 + $0x34] sm:$0xf]
      %v266 = vld [vmem:[%s211] sm:$0xf]
      %v267 = vld [vmem:[%s211 + $0x4] sm:$0xf]
      %v282 = vunpack.c.l.b16 %v252
      %v283 = vunpack.c.l.b16 %v253
      %v284 = vunpack.c.l.b16 %v254
      %v285 = vunpack.c.l.b16 %v255
      %v286 = vunpack.c.l.b16 %v256
      %v287 = vunpack.c.l.b16 %v257
      %v288 = vunpack.c.l.b16 %v258
      %v289 = vunpack.c.l.b16 %v259
      %v290 = vunpack.c.l.b16 %v260
      %v291 = vunpack.c.l.b16 %v261
      %v292 = vunpack.c.l.b16 %v262
      %v293 = vunpack.c.l.b16 %v263
      %v294 = vunpack.c.l.b16 %v264
      %v295 = vunpack.c.l.b16 %v265
      %v296 = vpack.c.b16 %v283, %v282
      %v297 = vpack.c.b16 %v285, %v284
      %v298 = vpack.c.b16 %v287, %v286
      %v299 = vpack.c.b16 %v289, %v288
      %v300 = vpack.c.b16 %v291, %v290
      %v301 = vpack.c.b16 %v293, %v292
      %v302 = vpack.c.b16 %v295, %v294
      %v305 = vunpack.c.l.b16 %v266
      %v306 = vunpack.c.l.b16 %v267
      %v307 = vpack.c.b16 %v306, %v305
      %vm309 = vcmask 130048
      %v311 = vsel %vm309, %v296, 0
      %v314 = vsel %vm309, %v297, 0
      %v317 = vsel %vm309, %v298, 0
      %v320 = vsel %vm309, %v299, 0
      %v323 = vsel %vm309, %v300, 0
      %v326 = vsel %vm309, %v301, 0
      %v329 = vsel %vm309, %v302, 0
      %331 = vmatprep.subr.bf16.mxu0 0
      %332 = vmatpush1.bf16.msra.mxu0 %v307
      %333 = vmatprep.subr.bf16.mxu0 0
      %334 = vmatpush1.bf16.msra.mxu0 0
      %335 = vmatprep.subr.bf16.mxu0 0
      %336 = vmatpush1.bf16.msra.mxu0 0
      %337 = vmatprep.subr.bf16.mxu0 0
      %338 = vmatpush1.bf16.msra.mxu0 0
      %339 = vmatprep.subr.bf16.mxu0 0
      %340 = vmatpush1.bf16.msra.mxu0 0
      %341 = vmatprep.subr.bf16.mxu0 0
      %342 = vmatpush1.bf16.msra.mxu0 0
      %343 = vmatprep.subr.bf16.mxu0 0
      %344 = vmatpush1.bf16.msra.mxu0 0
      %345 = vmatprep.subr.bf16.mxu0 0
      %346 = vmatpush1.bf16.msra.mxu0 0
      %347 = vmatprep.subr.bf16.mxu0 0
      %348 = vmatpush1.bf16.msra.mxu0 0
      %349 = vmatprep.subr.bf16.mxu0 0
      %350 = vmatpush1.bf16.msra.mxu0 0
      %351 = vmatprep.subr.bf16.mxu0 0
      %352 = vmatpush1.bf16.msra.mxu0 0
      %353 = vmatprep.subr.bf16.mxu0 0
      %354 = vmatpush1.bf16.msra.mxu0 0
      %355 = vmatprep.subr.bf16.mxu0 0
      %356 = vmatpush1.bf16.msra.mxu0 0
      %357 = vmatprep.subr.bf16.mxu0 0
      %358 = vmatpush1.bf16.msra.mxu0 0
      %359 = vmatprep.subr.bf16.mxu0 0
      %360 = vmatpush1.bf16.msra.mxu0 0
      %361 = vmatprep.subr.bf16.mxu0 0
      %362 = vmatpush1.bf16.msra.mxu0 0
      %363 = vmatprep.mubr.bf16.mxu0 0
      %364 = vmatmul.mubr.bf16.gmra.mrb[0].mxu0 %v311
      %v365 = vpop.f32.mrb[0].mxu0
      %v366 = vadd.f32 0.0, %v365
      %v367 = vpop.f32.mrb[0].mxu0
      %v368 = vpop.f32.mrb[0].mxu0
      %v369 = vadd.f32 0.0, %v368
      %v370 = vpop.f32.mrb[0].mxu0
      %371 = vmatprep.mubr.bf16.mxu0 0
      %372 = vmatmul.mubr.bf16.gmra.mrb[0].mxu0 %v314
      %v373 = vpop.f32.mrb[0].mxu0
      %v374 = vadd.f32 0.0, %v373
      %v375 = vpop.f32.mrb[0].mxu0
      %v376 = vpop.f32.mrb[0].mxu0
      %v377 = vadd.f32 0.0, %v376
      %v378 = vpop.f32.mrb[0].mxu0
      %379 = vmatprep.mubr.bf16.mxu0 0
      %380 = vmatmul.mubr.bf16.gmra.mrb[0].mxu0 %v317
      %v381 = vpop.f32.mrb[0].mxu0
      %v382 = vadd.f32 0.0, %v381
      %v383 = vpop.f32.mrb[0].mxu0
      %v384 = vpop.f32.mrb[0].mxu0
      %v385 = vadd.f32 0.0, %v384
      %v386 = vpop.f32.mrb[0].mxu0
      %387 = vmatprep.mubr.bf16.mxu0 0
      %388 = vmatmul.mubr.bf16.gmra.mrb[0].mxu0 %v320
      %v389 = vpop.f32.mrb[0].mxu0
      %v390 = vadd.f32 0.0, %v389
      %v391 = vpop.f32.mrb[0].mxu0
      %v392 = vpop.f32.mrb[0].mxu0
      %v393 = vadd.f32 0.0, %v392
      %v394 = vpop.f32.mrb[0].mxu0
      %395 = vmatprep.mubr.bf16.mxu0 0
      %396 = vmatmul.mubr.bf16.gmra.mrb[0].mxu0 %v323
      %v397 = vpop.f32.mrb[0].mxu0
      %v398 = vadd.f32 0.0, %v397
      %v399 = vpop.f32.mrb[0].mxu0
      %v400 = vpop.f32.mrb[0].mxu0
      %v401 = vadd.f32 0.0, %v400
      %v402 = vpop.f32.mrb[0].mxu0
      %403 = vmatprep.mubr.bf16.mxu0 0
      %404 = vmatmul.mubr.bf16.gmra.mrb[0].mxu0 %v326
      %v405 = vpop.f32.mrb[0].mxu0
      %v406 = vadd.f32 0.0, %v405
      %v407 = vpop.f32.mrb[0].mxu0
      %v408 = vpop.f32.mrb[0].mxu0
      %v409 = vadd.f32 0.0, %v408
      %v410 = vpop.f32.mrb[0].mxu0
      %411 = vmatprep.mubr.bf16.mxu0 0
      %412 = vmatmul.mubr.bf16.gmra.mrb[0].mxu0 %v329
      %v413 = vpop.f32.mrb[0].mxu0
      %v414 = vadd.f32 0.0, %v413
      %v415 = vpop.f32.mrb[0].mxu0
      %v416 = vpop.f32.mrb[0].mxu0
      %v417 = vadd.f32 0.0, %v416
      %v418 = vpop.f32.mrb[0].mxu0
      %419 = vdwg.mxu0
      %v420 = vadd.f32 %v238, %v366
      %v421 = vadd.f32 %v239, %v369
      %v422 = vadd.f32 %v240, %v374
      %v423 = vadd.f32 %v241, %v377
      %v424 = vadd.f32 %v242, %v382
      %v425 = vadd.f32 %v243, %v385
      %v426 = vadd.f32 %v244, %v390
      %v427 = vadd.f32 %v245, %v393
      %v428 = vadd.f32 %v246, %v398
      %v429 = vadd.f32 %v247, %v401
      %v430 = vadd.f32 %v248, %v406
      %v431 = vadd.f32 %v249, %v409
      %v432 = vadd.f32 %v250, %v414
      %v433 = vadd.f32 %v251, %v417
      %434 = vst [vmem:[#allocation2] sm:$0xff] %v420
      %435 = vst [vmem:[#allocation2 + $0x8] sm:$0xff] %v421
      %436 = vst [vmem:[#allocation2 + $0x10] sm:$0xff] %v422
      %437 = vst [vmem:[#allocation2 + $0x18] sm:$0xff] %v423
      %438 = vst [vmem:[#allocation2 + $0x20] sm:$0xff] %v424
      %439 = vst [vmem:[#allocation2 + $0x28] sm:$0xff] %v425
      %440 = vst [vmem:[#allocation2 + $0x30] sm:$0xff] %v426
      %441 = vst [vmem:[#allocation2 + $0x38] sm:$0xff] %v427
      %442 = vst [vmem:[#allocation2 + $0x40] sm:$0xff] %v428
      %443 = vst [vmem:[#allocation2 + $0x48] sm:$0xff] %v429
      %444 = vst [vmem:[#allocation2 + $0x50] sm:$0xff] %v430
      %445 = vst [vmem:[#allocation2 + $0x58] sm:$0xff] %v431
      %446 = vst [vmem:[#allocation2 + $0x60] sm:$0xff] %v432
      %447 = vst [vmem:[#allocation2 + $0x68] sm:$0xff] %v433
      // Predicated region
      $region37: #{striding_conv_subsampling.3} parent=31 // pred_check
        %p448 = pneg %p220
      $region38: #{striding_conv_subsampling.3} parent=31 // pred_check_branch
        %450 = sbr.rel (%p448) target = $region40
      $region39: #{striding_conv_subsampling.3} parent=31 // pred_region
        %v451 = vld [vmem:[#allocation2] sm:$0xff]
        %v452 = vld [vmem:[#allocation2 + $0x8] sm:$0xff]
        %v453 = vld [vmem:[#allocation2 + $0x10] sm:$0xff]
        %v454 = vld [vmem:[#allocation2 + $0x18] sm:$0xff]
        %v455 = vld [vmem:[#allocation2 + $0x20] sm:$0xff]
        %v456 = vld [vmem:[#allocation2 + $0x28] sm:$0xff]
        %v457 = vld [vmem:[#allocation2 + $0x30] sm:$0xff]
        %v458 = vld [vmem:[#allocation2 + $0x38] sm:$0xff]
        %v459 = vld [vmem:[#allocation2 + $0x40] sm:$0xff]
        %v460 = vld [vmem:[#allocation2 + $0x48] sm:$0xff]
        %v461 = vld [vmem:[#allocation2 + $0x50] sm:$0xff]
        %v462 = vld [vmem:[#allocation2 + $0x58] sm:$0xff]
        %v463 = vld [vmem:[#allocation2 + $0x60] sm:$0xff]
        %v464 = vld [vmem:[#allocation2 + $0x68] sm:$0xff]
        %v465 = vld [vmem:[%s2] sm:$0x1]
        %v467 = vlaneseq
        %v468 = vshrl.u32 %v467, 7
        %v469 = vsub.s32 0, %v468
        %v470 = vrot.slane %v465, %v469
        %v472 = vadd.f32 %v451, %v470
        %v473 = vadd.f32 %v452, %v470
        %v474 = vadd.f32 %v453, %v470
        %v475 = vadd.f32 %v454, %v470
        %v476 = vadd.f32 %v455, %v470
        %v477 = vadd.f32 %v456, %v470
        %v478 = vadd.f32 %v457, %v470
        %v479 = vadd.f32 %v458, %v470
        %v480 = vadd.f32 %v459, %v470
        %v481 = vadd.f32 %v460, %v470
        %v482 = vadd.f32 %v461, %v470
        %v483 = vadd.f32 %v462, %v470
        %v484 = vadd.f32 %v463, %v470
        %v485 = vadd.f32 %v464, %v470
        %v486 = vmax.f32 %v472, 0.0
        %v487 = vmax.f32 %v473, 0.0
        %v488 = vmax.f32 %v474, 0.0
        %v489 = vmax.f32 %v475, 0.0
        %v490 = vmax.f32 %v476, 0.0
        %v491 = vmax.f32 %v477, 0.0
        %v492 = vmax.f32 %v478, 0.0
        %v493 = vmax.f32 %v479, 0.0
        %v494 = vmax.f32 %v480, 0.0
        %v495 = vmax.f32 %v481, 0.0
        %v496 = vmax.f32 %v482, 0.0
        %v497 = vmax.f32 %v483, 0.0
        %v498 = vmax.f32 %v484, 0.0
        %v499 = vmax.f32 %v485, 0.0
        %v500 = vpack.c.bf16 %v487, %v486
        %v501 = vpack.c.bf16 %v489, %v488
        %v502 = vpack.c.bf16 %v491, %v490
        %v503 = vpack.c.bf16 %v493, %v492
        %v504 = vpack.c.bf16 %v495, %v494
        %v505 = vpack.c.bf16 %v497, %v496
        %v506 = vpack.c.bf16 %v499, %v498
        %v514 = vunpack.c.l.b16 %v500
        %v515 = vunpack.c.h.b16 %v500
        %v516 = vunpack.c.l.b16 %v501
        %v517 = vunpack.c.h.b16 %v501
        %v518 = vunpack.c.l.b16 %v502
        %v519 = vunpack.c.h.b16 %v502
        %v520 = vunpack.c.l.b16 %v503
        %v521 = vunpack.c.h.b16 %v503
        %v522 = vunpack.c.l.b16 %v504
        %v523 = vunpack.c.h.b16 %v504
        %v524 = vunpack.c.l.b16 %v505
        %v525 = vunpack.c.h.b16 %v505
        %v526 = vunpack.c.l.b16 %v506
        %v527 = vunpack.c.h.b16 %v506
        %v528 = vpack.c.b16 %v514, %v514
        %v529 = vpack.c.b16 %v515, %v515
        %v530 = vpack.c.b16 %v516, %v516
        %v531 = vpack.c.b16 %v517, %v517
        %v532 = vpack.c.b16 %v518, %v518
        %v533 = vpack.c.b16 %v519, %v519
        %v534 = vpack.c.b16 %v520, %v520
        %v535 = vpack.c.b16 %v521, %v521
        %v536 = vpack.c.b16 %v522, %v522
        %v537 = vpack.c.b16 %v523, %v523
        %v538 = vpack.c.b16 %v524, %v524
        %v539 = vpack.c.b16 %v525, %v525
        %v540 = vpack.c.b16 %v526, %v526
        %v541 = vpack.c.b16 %v527, %v527
        %556 = vst [vmem:[%s217] sm:$0xf] %v528
        %557 = vst [vmem:[%s217 + $0x4] sm:$0xf] %v529
        %558 = vst [vmem:[%s217 + $0x8] sm:$0xf] %v530
        %559 = vst [vmem:[%s217 + $0xc] sm:$0xf] %v531
        %560 = vst [vmem:[%s217 + $0x10] sm:$0xf] %v532
        %561 = vst [vmem:[%s217 + $0x14] sm:$0xf] %v533
        %562 = vst [vmem:[%s217 + $0x18] sm:$0xf] %v534
        %563 = vst [vmem:[%s217 + $0x1c] sm:$0xf] %v535
        %564 = vst [vmem:[%s217 + $0x20] sm:$0xf] %v536
        %565 = vst [vmem:[%s217 + $0x24] sm:$0xf] %v537
        %566 = vst [vmem:[%s217 + $0x28] sm:$0xf] %v538
        %567 = vst [vmem:[%s217 + $0x2c] sm:$0xf] %v539
        %568 = vst [vmem:[%s217 + $0x30] sm:$0xf] %v540
        %569 = vst [vmem:[%s217 + $0x34] sm:$0xf] %v541
      $region40: #{striding_conv_subsampling.3} parent=31 // pred_fallthru
        _
      %s570 = smul.u32 14, %s18
      %p571 = scmp.lt.s32.totalorder %s570, 27
      %s572 = scalar_select %p571, %s570, 27
      %s573 = smul.addr %s572, 4
      %s574 = scalar_lea.vmem %s3, %s573
      // Predicated region
      $region41: #{striding_conv_subsampling.3} parent=31 // pred_check
        %p575 = pneg %p119
      $region42: #{striding_conv_subsampling.3} parent=31 // pred_check_branch
        %577 = sbr.rel (%p575) target = $region44
      $region43: #{striding_conv_subsampling.3} parent=31 // pred_region
        %s578 = smul.u32 14, %s18
      $region44: #{striding_conv_subsampling.3} parent=31 // pred_fallthru
        _
    $region32: #{striding_conv_subsampling.3} parent=5 // pred_fallthru
      _
    %p579 = scmp.le.s32.totalorder 2, %s9
    // Predicated region
    $region45: #{striding_conv_subsampling.3} parent=5 // pred_check
      %p580 = pneg %p579
    $region46: #{striding_conv_subsampling.3} parent=5 // pred_check_branch
      %582 = sbr.rel (%p580) target = $region48
    $region47: #{striding_conv_subsampling.3} parent=5 // pred_region
      %s583 = ssub.s32 %s9, 2
      // Predicated region
      $region49: #{striding_conv_subsampling.3} parent=47 // pred_check
        %p584 = pneg %p125
      $region50: #{striding_conv_subsampling.3} parent=47 // pred_check_branch
        %586 = sbr.rel (%p584) target = $region52
      $region51: #{striding_conv_subsampling.3} parent=47 // pred_region
        %s587 = smul.u32 14, %s20
        %p588 = scmp.lt.s32.totalorder %s587, 27
        %s589 = scalar_select %p588, %s587, 27
        %s590 = smul.addr %s589, 4
        %s591 = scalar_lea.vmem %s3, %s590
      $region52: #{striding_conv_subsampling.3} parent=47 // pred_fallthru
        _
    $region48: #{striding_conv_subsampling.3} parent=5 // pred_fallthru
      _
  $region6: #{striding_conv_subsampling.3} parent=0 // loop_footer
    %s13 = sadd.s32 1, %s9
  $region7: #{striding_conv_subsampling.3} parent=0 // loop_footer_branch
    %8 = sbr.rel target = $region3
  $region8: #{striding_conv_subsampling.3} parent=0 // loop_exit
    _

// kernel: striding_conv_subsampling.4
$region0: #{striding_conv_subsampling.4}
  #allocation0 [shape = 'u32[]', space=smem, size = 0x4, offset = 0x4, fixed_abs, tag = 'smem constant byte address 0x4 - core index']
  #allocation1 [shape = 'u32[144,128]{1,0:T(1,128)}', space=vmem, size = 0x12000, scoped, tag = 'internal scratch']
  %s0 = inlined_call_operand.vmem [shape: bf16[2,3,16,192], index: 0, kind: input, shape index: {}]
  %s1 = inlined_call_operand.vmem [shape: bf16[192,128], index: 1, kind: input, shape index: {}]
  %s2 = inlined_call_operand.vmem [shape: bf16[96,128], index: 2, kind: input, shape index: {}]
  %s3 = inlined_call_operand.vmem [shape: f32[1,128], index: 3, kind: input, shape index: {}]
  %s4 = inlined_call_operand.vmem [shape: bf16[2,48,128], index: 4, kind: output, shape index: {}]
  %s5 = sld [smem:[#allocation0]]
  $region49: #{striding_conv_subsampling.4} parent=0
    _
  %s7 = ssub.s32 1, %s5
  %s8 = scalar_select 0, %s7, %s5
  loop: start=0, step=1, limit=4
  $region2: #{striding_conv_subsampling.4} parent=0 // loop_pre_header
    _
  $region3: #{striding_conv_subsampling.4} parent=0 // loop_header
    %s10 = sphi 0, %s14
    %p11 = scmp.ge.s32.totalorder %s10, 4
    %s17 = sphi 0, %s29
    %s18 = sphi 0, %s25
    %s19 = sphi 0, %s17
    %s20 = sphi 0, %s18
    %s21 = sphi 0, %s19
    %s22 = sphi 0, %s20
    %s34 = sphi 0, %s36
    %s37 = sphi 0, %s34
    %s38 = sphi 0, %s37
    %s54 = sphi 0, %s38
    %s58 = sphi 0, %s58
    %s60 = sphi 0, %s58
    %s61 = sphi 0, %s60
    %s75 = sphi 0, %s61
    %s79 = sphi 0, %s79
    %s81 = sphi 0, %s79
    %s82 = sphi 0, %s81
    %s96 = sphi 0, %s82
    %s100 = sphi 0, %s100
    %s102 = sphi 0, %s100
    %s103 = sphi 0, %s102
    %s117 = sphi 0, %s103
    %s125 = sphi 0, %s127
    %s128 = sphi 0, %s125
    %s129 = sphi 0, %s128
    %s145 = sphi 0, %s129
  $region4: #{striding_conv_subsampling.4} parent=0 // loop_header_branch
    %13 = sbr.rel (%p11) target = $region8
  $region5: #{striding_conv_subsampling.4} parent=0 // loop_body
    %s15 = ssub.s32 %s10, 1
    %s16 = ssub.s32 %s10, 2
    %s23 = sadd.s32 1, %s18
    %p24 = scmp.ge.s32.totalorder %s23, 1
    %s25 = scalar_select %p24, 0, %s23
    %s26 = sadd.s32 1, %s17
    %s27 = scalar_select %p24, %s26, %s17
    %p28 = scmp.ge.s32.totalorder %s27, 2
    %s29 = scalar_select %p28, 0, %s27
    %s30 = ssub.s32 %s17, %s29
    %s31 = ssub.s32 %s18, %s25
    %s32 = sor.u32 %s30, %s31
    %p33 = scmp.eq.s32.totalorder %s32, 0
    %s35 = sadd.s32 %s34, 1
    %s36 = scalar_select %p33, %s34, %s35
    %p39 = pneg %p33
    %p40 = scmp.eq.s32.totalorder %s10, 1
    %p41 = por %p39, %p40
    %p42 = scmp.ne.s32.totalorder %s34, %s37
    %p43 = scmp.eq.s32.totalorder %s10, 0
    %p44 = por %p42, %p43
    %p45 = scmp.ne.s32.totalorder %s34, %s37
    %p46 = scmp.eq.s32.totalorder %s15, 1
    %p47 = por %p45, %p46
    %p48 = scmp.ne.s32.totalorder %s37, %s38
    %p49 = scmp.eq.s32.totalorder %s15, 0
    %p50 = por %p48, %p49
    %p51 = scmp.ne.s32.totalorder %s37, %s38
    %p52 = scmp.eq.s32.totalorder %s16, 1
    %p53 = por %p51, %p52
    %p55 = scmp.ne.s32.totalorder %s38, %s54
    %p56 = scmp.eq.s32.totalorder %s16, 0
    %p57 = por %p55, %p56
    %s59 = sadd.s32 %s58, 1
    %p62 = scmp.eq.s32.totalorder %s10, 1
    %p63 = scmp.ne.s32.totalorder %s58, %s60
    %p64 = scmp.eq.s32.totalorder %s10, 0
    %p65 = por %p63, %p64
    %p66 = scmp.ne.s32.totalorder %s58, %s60
    %p67 = scmp.eq.s32.totalorder %s15, 1
    %p68 = por %p66, %p67
    %p69 = scmp.ne.s32.totalorder %s60, %s61
    %p70 = scmp.eq.s32.totalorder %s15, 0
    %p71 = por %p69, %p70
    %p72 = scmp.ne.s32.totalorder %s60, %s61
    %p73 = scmp.eq.s32.totalorder %s16, 1
    %p74 = por %p72, %p73
    %p76 = scmp.ne.s32.totalorder %s61, %s75
    %p77 = scmp.eq.s32.totalorder %s16, 0
    %p78 = por %p76, %p77
    %s80 = sadd.s32 %s79, 1
    %p83 = scmp.eq.s32.totalorder %s10, 1
    %p84 = scmp.ne.s32.totalorder %s79, %s81
    %p85 = scmp.eq.s32.totalorder %s10, 0
    %p86 = por %p84, %p85
    %p87 = scmp.ne.s32.totalorder %s79, %s81
    %p88 = scmp.eq.s32.totalorder %s15, 1
    %p89 = por %p87, %p88
    %p90 = scmp.ne.s32.totalorder %s81, %s82
    %p91 = scmp.eq.s32.totalorder %s15, 0
    %p92 = por %p90, %p91
    %p93 = scmp.ne.s32.totalorder %s81, %s82
    %p94 = scmp.eq.s32.totalorder %s16, 1
    %p95 = por %p93, %p94
    %p97 = scmp.ne.s32.totalorder %s82, %s96
    %p98 = scmp.eq.s32.totalorder %s16, 0
    %p99 = por %p97, %p98
    %s101 = sadd.s32 %s100, 1
    %p104 = scmp.eq.s32.totalorder %s10, 1
    %p105 = scmp.ne.s32.totalorder %s100, %s102
    %p106 = scmp.eq.s32.totalorder %s10, 0
    %p107 = por %p105, %p106
    %p108 = scmp.ne.s32.totalorder %s100, %s102
    %p109 = scmp.eq.s32.totalorder %s15, 1
    %p110 = por %p108, %p109
    %p111 = scmp.ne.s32.totalorder %s102, %s103
    %p112 = scmp.eq.s32.totalorder %s15, 0
    %p113 = por %p111, %p112
    %p114 = scmp.ne.s32.totalorder %s102, %s103
    %p115 = scmp.eq.s32.totalorder %s16, 1
    %p116 = por %p114, %p115
    %p118 = scmp.ne.s32.totalorder %s103, %s117
    %p119 = scmp.eq.s32.totalorder %s16, 0
    %p120 = por %p118, %p119
    %s121 = ssub.s32 %s17, %s29
    %s122 = ssub.s32 %s18, %s25
    %s123 = sor.u32 %s121, %s122
    %p124 = scmp.eq.s32.totalorder %s123, 0
    %s126 = sadd.s32 %s125, 1
    %s127 = scalar_select %p124, %s125, %s126
    %p130 = pneg %p124
    %p131 = scmp.eq.s32.totalorder %s10, 1
    %p132 = por %p130, %p131
    %p133 = scmp.ne.s32.totalorder %s125, %s128
    %p134 = scmp.eq.s32.totalorder %s10, 0
    %p135 = por %p133, %p134
    %p136 = scmp.ne.s32.totalorder %s125, %s128
    %p137 = scmp.eq.s32.totalorder %s15, 1
    %p138 = por %p136, %p137
    %p139 = scmp.ne.s32.totalorder %s128, %s129
    %p140 = scmp.eq.s32.totalorder %s15, 0
    %p141 = por %p139, %p140
    %p142 = scmp.ne.s32.totalorder %s128, %s129
    %p143 = scmp.eq.s32.totalorder %s16, 1
    %p144 = por %p142, %p143
    %p146 = scmp.ne.s32.totalorder %s129, %s145
    %p147 = scmp.eq.s32.totalorder %s16, 0
    %p148 = por %p146, %p147
    %p149 = scmp.le.s32.totalorder 1, %s10
    %p150 = scmp.lt.s32.totalorder %s10, 3
    %p151 = pnand %p149, %p150
    %p152 = pneg %p151
    // Predicated region
    $region9: #{striding_conv_subsampling.4} parent=5 // pred_check
      _
    $region10: #{striding_conv_subsampling.4} parent=5 // pred_check_branch
      %154 = sbr.rel (%p151) target = $region12
    $region11: #{striding_conv_subsampling.4} parent=5 // pred_region
      %s155 = ssub.s32 %s10, 1
      // Predicated region
      $region13: #{striding_conv_subsampling.4} parent=11 // pred_check
        %p156 = pneg %p71
      $region14: #{striding_conv_subsampling.4} parent=11 // pred_check_branch
        %158 = sbr.rel (%p156) target = $region16
      $region15: #{striding_conv_subsampling.4} parent=11 // pred_region
        _
      $region16: #{striding_conv_subsampling.4} parent=11 // pred_fallthru
        _
      // Predicated region
      $region17: #{striding_conv_subsampling.4} parent=11 // pred_check
        %p159 = pneg %p92
      $region18: #{striding_conv_subsampling.4} parent=11 // pred_check_branch
        %161 = sbr.rel (%p159) target = $region20
      $region19: #{striding_conv_subsampling.4} parent=11 // pred_region
        _
      $region20: #{striding_conv_subsampling.4} parent=11 // pred_fallthru
        _
      // Predicated region
      $region21: #{striding_conv_subsampling.4} parent=11 // pred_check
        %p162 = pneg %p113
      $region22: #{striding_conv_subsampling.4} parent=11 // pred_check_branch
        %164 = sbr.rel (%p162) target = $region24
      $region23: #{striding_conv_subsampling.4} parent=11 // pred_region
        _
      $region24: #{striding_conv_subsampling.4} parent=11 // pred_fallthru
        _
    $region12: #{striding_conv_subsampling.4} parent=5 // pred_fallthru
      _
    %p165 = scmp.lt.s32.totalorder %s10, 2
    // Predicated region
    $region25: #{striding_conv_subsampling.4} parent=5 // pred_check
      %p166 = pneg %p165
    $region26: #{striding_conv_subsampling.4} parent=5 // pred_check_branch
      %168 = sbr.rel (%p166) target = $region28
    $region27: #{striding_conv_subsampling.4} parent=5 // pred_region
      // Predicated region
      $region29: #{striding_conv_subsampling.4} parent=27 // pred_check
        %p169 = pneg %p44
      $region30: #{striding_conv_subsampling.4} parent=27 // pred_check_branch
        %171 = sbr.rel (%p169) target = $region32
      $region31: #{striding_conv_subsampling.4} parent=27 // pred_region
        %s172 = smul.u32 3, %s18
        %p173 = scmp.lt.s32.totalorder %s17, 1
        %s174 = scalar_select %p173, %s17, 1
        %p175 = scmp.lt.s32.totalorder %s172, 2
        %s176 = scalar_select %p175, %s172, 2
        %s177 = smul.addr %s176, 4
        %s178 = smul.addr %s174, 12
        %s179 = sadd.s32 %s177, %s178
        %s180 = smul.addr %s179, 4
        %s181 = scalar_lea.vmem %s0, %s180
        %s182 = smul.u32 3, %s18
      $region32: #{striding_conv_subsampling.4} parent=27 // pred_fallthru
        _
    $region28: #{striding_conv_subsampling.4} parent=5 // pred_fallthru
      _
    %p183 = scmp.le.s32.totalorder 1, %s10
    %p184 = scmp.lt.s32.totalorder %s10, 3
    %p185 = pnand %p183, %p184
    %p186 = pneg %p185
    // Predicated region
    $region33: #{striding_conv_subsampling.4} parent=5 // pred_check
      _
    $region34: #{striding_conv_subsampling.4} parent=5 // pred_check_branch
      %188 = sbr.rel (%p185) target = $region36
    $region35: #{striding_conv_subsampling.4} parent=5 // pred_region
      %s189 = ssub.s32 %s10, 1
      %s190 = smul.u32 3, %s20
      %p191 = scmp.lt.s32.totalorder %s19, 1
      %s192 = scalar_select %p191, %s19, 1
      %p193 = scmp.lt.s32.totalorder %s190, 2
      %s194 = scalar_select %p193, %s190, 2
      %s195 = smul.addr %s194, 4
      %s196 = smul.addr %s192, 12
      %s197 = sadd.s32 %s195, %s196
      %s198 = smul.addr %s197, 4
      %s199 = scalar_lea.vmem %s0, %s198
      %p200 = pneg %p50
      %p201 = pneg %p47
      %p202 = pneg %p71
      %p203 = pneg %p68
      %p204 = pneg %p92
      %p205 = pneg %p89
      %p206 = pneg %p113
      %p207 = pneg %p110
      %p208 = pneg %p141
      %p209 = pneg %p138
      %s210 = smul.u32 6, %s20
      %p211 = scmp.lt.s32.totalorder %s19, 1
      %s212 = scalar_select %p211, %s19, 1
      %p213 = scmp.lt.s32.totalorder %s210, 5
      %s214 = scalar_select %p213, %s210, 5
      %s215 = smul.addr %s212, 6
      %s216 = sadd.s32 %s214, %s215
      %s217 = smul.addr %s216, 4
      %s218 = scalar_lea.vmem %s4, %s217
      %s219 = smul.u32 3, %s20
      %p220 = scmp.lt.s32.totalorder %s19, 1
      %s221 = scalar_select %p220, %s19, 1
      %p222 = scmp.lt.s32.totalorder %s219, 2
      %s223 = scalar_select %p222, %s219, 2
      %s224 = smul.addr %s223, 4
      %s225 = smul.addr %s221, 12
      %s226 = sadd.s32 %s224, %s225
      %s227 = smul.addr %s226, 4
      %s228 = scalar_lea.vmem %s0, %s227
      %s229 = smul.u32 3, %s20
      %s230 = smul.u32 6, %s20
      %p231 = scmp.lt.s32.totalorder %s19, 1
      %s232 = scalar_select %p231, %s19, 1
      %p233 = scmp.lt.s32.totalorder %s230, 5
      %s234 = scalar_select %p233, %s230, 5
      %s235 = smul.addr %s232, 6
      %s236 = sadd.s32 %s234, %s235
      %s237 = smul.addr %s236, 4
      %s238 = scalar_lea.vmem %s4, %s237
      %s239 = smul.u32 6, %s20
      %v241 = vld [vmem:[%s228] sm:$0xff]
      %v242 = vld [vmem:[%s228 + $0x8] sm:$0xff]
      %v243 = vld [vmem:[%s228 + $0x10] sm:$0xff]
      %v244 = vld [vmem:[%s228 + $0x18] sm:$0xff]
      %v245 = vld [vmem:[%s228 + $0x20] sm:$0xff]
      %v246 = vld [vmem:[%s228 + $0x28] sm:$0xff]
      %v253 = vunpack.c.l.b16 %v241
      %v254 = vunpack.c.l.b16 %v242
      %v255 = vunpack.c.l.b16 %v243
      %v256 = vunpack.c.l.b16 %v244
      %v257 = vunpack.c.l.b16 %v245
      %v258 = vunpack.c.l.b16 %v246
      %v259 = vpack.c.b16 %v254, %v253
      %v260 = vpack.c.b16 %v256, %v255
      %v261 = vpack.c.b16 %v258, %v257
      %v263 = vshrl.u32 %v259, 16
      %v265 = vshll.u32 %v259, 16
      %v267 = vrot.slane %v265, 1
      %v268 = vor.u32 %v263, %v267
      %v270 = vshrl.u32 %v260, 16
      %v272 = vshll.u32 %v260, 16
      %v274 = vrot.slane %v272, 1
      %v275 = vor.u32 %v270, %v274
      %v277 = vshrl.u32 %v261, 16
      %v279 = vshll.u32 %v261, 16
      %v281 = vrot.slane %v279, 1
      %v282 = vor.u32 %v277, %v281
      %v286 = vpack.c.b16 %v253, %v253
      %v287 = vpack.c.b16 %v255, %v255
      %v288 = vpack.c.b16 %v257, %v257
      %v290 = vshll.u32 %v286, 16
      %v292 = vrot.slane %v290, 1
      %v294 = vshll.u32 %v287, 16
      %v296 = vrot.slane %v294, 1
      %v298 = vshll.u32 %v288, 16
      %v300 = vrot.slane %v298, 1
      %vm304 = vcmask 1047552
      %vm305 = vsmask.f32 7424
      %vm306 = vmand %vm304, %vm305
      %v307 = vsel %vm306, %v268, %v292
      %v308 = vsel %vm306, %v275, %v296
      %v309 = vsel %vm306, %v282, %v300
      %v310 = vld [vmem:[%s1] sm:$0xf]
      %v311 = vld [vmem:[%s1 + $0x4] sm:$0xf]
      %v312 = vld [vmem:[%s1 + $0x8] sm:$0xf]
      %v313 = vld [vmem:[%s1 + $0xc] sm:$0xf]
      %v314 = vld [vmem:[%s1 + $0x10] sm:$0xf]
      %v315 = vld [vmem:[%s1 + $0x14] sm:$0xf]
      %v316 = vld [vmem:[%s1 + $0x18] sm:$0xf]
      %v317 = vld [vmem:[%s1 + $0x1c] sm:$0xf]
      %v318 = vld [vmem:[%s1 + $0x20] sm:$0xf]
      %v319 = vld [vmem:[%s1 + $0x24] sm:$0xf]
      %v320 = vld [vmem:[%s1 + $0x28] sm:$0xf]
      %v321 = vld [vmem:[%s1 + $0x2c] sm:$0xf]
      %v322 = vld [vmem:[%s1 + $0x30] sm:$0xf]
      %v323 = vld [vmem:[%s1 + $0x34] sm:$0xf]
      %v324 = vld [vmem:[%s1 + $0x38] sm:$0xf]
      %v325 = vld [vmem:[%s1 + $0x3c] sm:$0xf]
      %v326 = vld [vmem:[%s1 + $0x40] sm:$0xf]
      %v327 = vld [vmem:[%s1 + $0x44] sm:$0xf]
      %v328 = vld [vmem:[%s1 + $0x48] sm:$0xf]
      %v329 = vld [vmem:[%s1 + $0x4c] sm:$0xf]
      %v330 = vld [vmem:[%s1 + $0x50] sm:$0xf]
      %v331 = vld [vmem:[%s1 + $0x54] sm:$0xf]
      %v332 = vld [vmem:[%s1 + $0x58] sm:$0xf]
      %v333 = vld [vmem:[%s1 + $0x5c] sm:$0xf]
      %v334 = vld [vmem:[%s2] sm:$0xf]
      %v335 = vld [vmem:[%s2 + $0x4] sm:$0xf]
      %v336 = vld [vmem:[%s2 + $0x8] sm:$0xf]
      %v337 = vld [vmem:[%s2 + $0xc] sm:$0xf]
      %v338 = vld [vmem:[%s2 + $0x10] sm:$0xf]
      %v339 = vld [vmem:[%s2 + $0x14] sm:$0xf]
      %v340 = vld [vmem:[%s2 + $0x18] sm:$0xf]
      %v341 = vld [vmem:[%s2 + $0x1c] sm:$0xf]
      %v342 = vld [vmem:[%s2 + $0x20] sm:$0xf]
      %v343 = vld [vmem:[%s2 + $0x24] sm:$0xf]
      %v344 = vld [vmem:[%s2 + $0x28] sm:$0xf]
      %v345 = vld [vmem:[%s2 + $0x2c] sm:$0xf]
      %v358 = vunpack.c.l.b16 %v334
      %v359 = vunpack.c.l.b16 %v335
      %v360 = vunpack.c.l.b16 %v336
      %v361 = vunpack.c.l.b16 %v337
      %v362 = vunpack.c.l.b16 %v338
      %v363 = vunpack.c.l.b16 %v339
      %v364 = vunpack.c.l.b16 %v340
      %v365 = vunpack.c.l.b16 %v341
      %v366 = vunpack.c.l.b16 %v342
      %v367 = vunpack.c.l.b16 %v343
      %v368 = vunpack.c.l.b16 %v344
      %v369 = vunpack.c.l.b16 %v345
      %v370 = vpack.c.b16 %v359, %v358
      %v371 = vpack.c.b16 %v361, %v360
      %v372 = vpack.c.b16 %v363, %v362
      %v373 = vpack.c.b16 %v365, %v364
      %v374 = vpack.c.b16 %v367, %v366
      %v375 = vpack.c.b16 %v369, %v368
      %vm382 = vcmask 785408
      %v384 = vsel %vm382, %v307, 0
      %v387 = vsel %vm382, %v308, 0
      %v390 = vsel %vm382, %v309, 0
      %392 = vmatprep.subr.bf16.mxu0 0
      %393 = vmatpush1.bf16.msra.mxu0 %v370
      %394 = vmatprep.subr.bf16.mxu0 0
      %395 = vmatpush1.bf16.msra.mxu0 %v371
      %396 = vmatprep.subr.bf16.mxu0 0
      %397 = vmatpush1.bf16.msra.mxu0 %v372
      %398 = vmatprep.subr.bf16.mxu0 0
      %399 = vmatpush1.bf16.msra.mxu0 %v373
      %400 = vmatprep.subr.bf16.mxu0 0
      %401 = vmatpush1.bf16.msra.mxu0 %v374
      %402 = vmatprep.subr.bf16.mxu0 0
      %403 = vmatpush1.bf16.msra.mxu0 %v375
      %404 = vmatprep.subr.bf16.mxu0 0
      %405 = vmatpush1.bf16.msra.mxu0 0
      %406 = vmatprep.subr.bf16.mxu0 0
      %407 = vmatpush1.bf16.msra.mxu0 0
      %408 = vmatprep.subr.bf16.mxu0 0
      %409 = vmatpush1.bf16.msra.mxu0 0
      %410 = vmatprep.subr.bf16.mxu0 0
      %411 = vmatpush1.bf16.msra.mxu0 0
      %412 = vmatprep.subr.bf16.mxu0 0
      %413 = vmatpush1.bf16.msra.mxu0 0
      %414 = vmatprep.subr.bf16.mxu0 0
      %415 = vmatpush1.bf16.msra.mxu0 0
      %416 = vmatprep.subr.bf16.mxu0 0
      %417 = vmatpush1.bf16.msra.mxu0 0
      %418 = vmatprep.subr.bf16.mxu0 0
      %419 = vmatpush1.bf16.msra.mxu0 0
      %420 = vmatprep.subr.bf16.mxu0 0
      %421 = vmatpush1.bf16.msra.mxu0 0
      %422 = vmatprep.subr.bf16.mxu0 0
      %423 = vmatpush1.bf16.msra.mxu0 0
      %424 = vmatprep.mubr.bf16.mxu0 0
      %425 = vmatmul.mubr.bf16.gmra.mrb[0].mxu0 %v384
      %v426 = vpop.f32.mrb[0].mxu0
      %v427 = vadd.f32 0.0, %v426
      %v428 = vpop.f32.mrb[0].mxu0
      %v429 = vpop.f32.mrb[0].mxu0
      %v430 = vadd.f32 0.0, %v429
      %v431 = vpop.f32.mrb[0].mxu0
      %432 = vmatprep.mubr.bf16.mxu0 0
      %433 = vmatmul.mubr.bf16.gmra.mrb[0].mxu0 %v387
      %v434 = vpop.f32.mrb[0].mxu0
      %v435 = vadd.f32 0.0, %v434
      %v436 = vpop.f32.mrb[0].mxu0
      %v437 = vpop.f32.mrb[0].mxu0
      %v438 = vadd.f32 0.0, %v437
      %v439 = vpop.f32.mrb[0].mxu0
      %440 = vmatprep.mubr.bf16.mxu0 0
      %441 = vmatmul.mubr.bf16.gmra.mrb[0].mxu0 %v390
      %v442 = vpop.f32.mrb[0].mxu0
      %v443 = vadd.f32 0.0, %v442
      %v444 = vpop.f32.mrb[0].mxu0
      %v445 = vpop.f32.mrb[0].mxu0
      %v446 = vadd.f32 0.0, %v445
      %v447 = vpop.f32.mrb[0].mxu0
      %448 = vdwg.mxu0
      %v449 = vunpack.c.h.b16 %v241
      %v450 = vunpack.c.h.b16 %v242
      %v451 = vunpack.c.h.b16 %v243
      %v452 = vunpack.c.h.b16 %v244
      %v453 = vunpack.c.h.b16 %v245
      %v454 = vunpack.c.h.b16 %v246
      %v455 = vpack.c.b16 %v450, %v449
      %v456 = vpack.c.b16 %v452, %v451
      %v457 = vpack.c.b16 %v454, %v453
      %v485 = vunpack.c.l.b16 %v310
      %v486 = vunpack.c.l.b16 %v311
      %v487 = vunpack.c.l.b16 %v312
      %v488 = vunpack.c.l.b16 %v313
      %v489 = vunpack.c.l.b16 %v314
      %v490 = vunpack.c.l.b16 %v315
      %v491 = vunpack.c.l.b16 %v316
      %v492 = vunpack.c.l.b16 %v317
      %v493 = vunpack.c.l.b16 %v318
      %v494 = vunpack.c.l.b16 %v319
      %v495 = vunpack.c.l.b16 %v320
      %v496 = vunpack.c.l.b16 %v321
      %v497 = vunpack.c.l.b16 %v322
      %v498 = vunpack.c.l.b16 %v323
      %v499 = vunpack.c.l.b16 %v324
      %v500 = vunpack.c.l.b16 %v325
      %v501 = vunpack.c.l.b16 %v326
      %v502 = vunpack.c.l.b16 %v327
      %v503 = vunpack.c.l.b16 %v328
      %v504 = vunpack.c.l.b16 %v329
      %v505 = vunpack.c.l.b16 %v330
      %v506 = vunpack.c.l.b16 %v331
      %v507 = vunpack.c.l.b16 %v332
      %v508 = vunpack.c.l.b16 %v333
      %v509 = vpack.c.b16 %v486, %v485
      %v510 = vpack.c.b16 %v488, %v487
      %v511 = vpack.c.b16 %v490, %v489
      %v512 = vpack.c.b16 %v492, %v491
      %v513 = vpack.c.b16 %v494, %v493
      %v514 = vpack.c.b16 %v496, %v495
      %v515 = vpack.c.b16 %v498, %v497
      %v516 = vpack.c.b16 %v500, %v499
      %v517 = vpack.c.b16 %v502, %v501
      %v518 = vpack.c.b16 %v504, %v503
      %v519 = vpack.c.b16 %v506, %v505
      %v520 = vpack.c.b16 %v508, %v507
      %vm533 = vcmask 523264
      %v535 = vsel %vm533, %v455, 0
      %v538 = vsel %vm533, %v456, 0
      %v541 = vsel %vm533, %v457, 0
      %543 = vmatprep.subr.bf16.mxu0 0
      %544 = vmatpush1.bf16.msra.mxu0 %v509
      %545 = vmatprep.subr.bf16.mxu0 0
      %546 = vmatpush1.bf16.msra.mxu0 %v510
      %547 = vmatprep.subr.bf16.mxu0 0
      %548 = vmatpush1.bf16.msra.mxu0 %v511
      %549 = vmatprep.subr.bf16.mxu0 0
      %550 = vmatpush1.bf16.msra.mxu0 %v512
      %551 = vmatprep.subr.bf16.mxu0 0
      %552 = vmatpush1.bf16.msra.mxu0 %v513
      %553 = vmatprep.subr.bf16.mxu0 0
      %554 = vmatpush1.bf16.msra.mxu0 %v514
      %555 = vmatprep.subr.bf16.mxu0 0
      %556 = vmatpush1.bf16.msra.mxu0 %v515
      %557 = vmatprep.subr.bf16.mxu0 0
      %558 = vmatpush1.bf16.msra.mxu0 %v516
      %559 = vmatprep.subr.bf16.mxu0 0
      %560 = vmatpush1.bf16.msra.mxu0 %v517
      %561 = vmatprep.subr.bf16.mxu0 0
      %562 = vmatpush1.bf16.msra.mxu0 %v518
      %563 = vmatprep.subr.bf16.mxu0 0
      %564 = vmatpush1.bf16.msra.mxu0 %v519
      %565 = vmatprep.subr.bf16.mxu0 0
      %566 = vmatpush1.bf16.msra.mxu0 %v520
      %567 = vmatprep.subr.bf16.mxu0 0
      %568 = vmatpush1.bf16.msra.mxu0 0
      %569 = vmatprep.subr.bf16.mxu0 0
      %570 = vmatpush1.bf16.msra.mxu0 0
      %571 = vmatprep.subr.bf16.mxu0 0
      %572 = vmatpush1.bf16.msra.mxu0 0
      %573 = vmatprep.subr.bf16.mxu0 0
      %574 = vmatpush1.bf16.msra.mxu0 0
      %575 = vmatprep.mubr.bf16.mxu0 %v535
      %576 = vmatmul.mubr.bf16.gmra.mrb[0].mxu0 %v259
      %v577 = vpop.f32.mrb[0].mxu0
      %v578 = vadd.f32 %v427, %v577
      %v579 = vpop.f32.mrb[0].mxu0
      %v580 = vpop.f32.mrb[0].mxu0
      %v581 = vadd.f32 %v430, %v580
      %v582 = vpop.f32.mrb[0].mxu0
      %583 = vmatprep.mubr.bf16.mxu0 %v538
      %584 = vmatmul.mubr.bf16.gmra.mrb[0].mxu0 %v260
      %v585 = vpop.f32.mrb[0].mxu0
      %v586 = vadd.f32 %v435, %v585
      %v587 = vpop.f32.mrb[0].mxu0
      %v588 = vpop.f32.mrb[0].mxu0
      %v589 = vadd.f32 %v438, %v588
      %v590 = vpop.f32.mrb[0].mxu0
      %591 = vmatprep.mubr.bf16.mxu0 %v541
      %592 = vmatmul.mubr.bf16.gmra.mrb[0].mxu0 %v261
      %v593 = vpop.f32.mrb[0].mxu0
      %v594 = vadd.f32 %v443, %v593
      %v595 = vpop.f32.mrb[0].mxu0
      %v596 = vpop.f32.mrb[0].mxu0
      %v597 = vadd.f32 %v446, %v596
      %v598 = vpop.f32.mrb[0].mxu0
      %599 = vdwg.mxu0
      %v600 = vld [vmem:[%s3] sm:$0x1]
      %v602 = vlaneseq
      %v603 = vshrl.u32 %v602, 7
      %v604 = vsub.s32 0, %v603
      %v605 = vrot.slane %v600, %v604
      %v607 = vadd.f32 %v578, %v605
      %v608 = vadd.f32 %v581, %v605
      %v609 = vadd.f32 %v586, %v605
      %v610 = vadd.f32 %v589, %v605
      %v611 = vadd.f32 %v594, %v605
      %v612 = vadd.f32 %v597, %v605
      %v613 = vmax.f32 %v607, 0.0
      %v614 = vmax.f32 %v608, 0.0
      %v615 = vmax.f32 %v609, 0.0
      %v616 = vmax.f32 %v610, 0.0
      %v617 = vmax.f32 %v611, 0.0
      %v618 = vmax.f32 %v612, 0.0
      %v619 = vpack.c.bf16 %v614, %v613
      %v620 = vpack.c.bf16 %v616, %v615
      %v621 = vpack.c.bf16 %v618, %v617
      %v625 = vunpack.c.l.b16 %v619
      %v626 = vunpack.c.h.b16 %v619
      %v627 = vunpack.c.l.b16 %v620
      %v628 = vunpack.c.h.b16 %v620
      %v629 = vunpack.c.l.b16 %v621
      %v630 = vunpack.c.h.b16 %v621
      %v631 = vpack.c.b16 %v625, %v625
      %v632 = vpack.c.b16 %v626, %v626
      %v633 = vpack.c.b16 %v627, %v627
      %v634 = vpack.c.b16 %v628, %v628
      %v635 = vpack.c.b16 %v629, %v629
      %v636 = vpack.c.b16 %v630, %v630
      %643 = vst [vmem:[%s238] sm:$0xf] %v631
      %644 = vst [vmem:[%s238 + $0x4] sm:$0xf] %v632
      %645 = vst [vmem:[%s238 + $0x8] sm:$0xf] %v633
      %646 = vst [vmem:[%s238 + $0xc] sm:$0xf] %v634
      %647 = vst [vmem:[%s238 + $0x10] sm:$0xf] %v635
      %648 = vst [vmem:[%s238 + $0x14] sm:$0xf] %v636
      %s649 = smul.u32 6, %s20
      %p650 = scmp.lt.s32.totalorder %s19, 1
      %s651 = scalar_select %p650, %s19, 1
      %p652 = scmp.lt.s32.totalorder %s649, 5
      %s653 = scalar_select %p652, %s649, 5
      %s654 = smul.addr %s651, 6
      %s655 = sadd.s32 %s653, %s654
      %s656 = smul.addr %s655, 4
      %s657 = scalar_lea.vmem %s4, %s656
      // Predicated region
      $region37: #{striding_conv_subsampling.4} parent=35 // pred_check
        %p658 = pneg %p138
      $region38: #{striding_conv_subsampling.4} parent=35 // pred_check_branch
        %660 = sbr.rel (%p658) target = $region40
      $region39: #{striding_conv_subsampling.4} parent=35 // pred_region
        %s661 = smul.u32 6, %s20
      $region40: #{striding_conv_subsampling.4} parent=35 // pred_fallthru
        _
    $region36: #{striding_conv_subsampling.4} parent=5 // pred_fallthru
      _
    %p662 = scmp.le.s32.totalorder 2, %s10
    // Predicated region
    $region41: #{striding_conv_subsampling.4} parent=5 // pred_check
      %p663 = pneg %p662
    $region42: #{striding_conv_subsampling.4} parent=5 // pred_check_branch
      %665 = sbr.rel (%p663) target = $region44
    $region43: #{striding_conv_subsampling.4} parent=5 // pred_region
      %s666 = ssub.s32 %s10, 2
      // Predicated region
      $region45: #{striding_conv_subsampling.4} parent=43 // pred_check
        %p667 = pneg %p144
      $region46: #{striding_conv_subsampling.4} parent=43 // pred_check_branch
        %669 = sbr.rel (%p667) target = $region48
      $region47: #{striding_conv_subsampling.4} parent=43 // pred_region
        %s670 = smul.u32 6, %s22
        %p671 = scmp.lt.s32.totalorder %s21, 1
        %s672 = scalar_select %p671, %s21, 1
        %p673 = scmp.lt.s32.totalorder %s670, 5
        %s674 = scalar_select %p673, %s670, 5
        %s675 = smul.addr %s672, 6
        %s676 = sadd.s32 %s674, %s675
        %s677 = smul.addr %s676, 4
        %s678 = scalar_lea.vmem %s4, %s677
      $region48: #{striding_conv_subsampling.4} parent=43 // pred_fallthru
        _
    $region44: #{striding_conv_subsampling.4} parent=5 // pred_fallthru
      _
  $region6: #{striding_conv_subsampling.4} parent=0 // loop_footer
    %s14 = sadd.s32 1, %s10
  $region7: #{striding_conv_subsampling.4} parent=0 // loop_footer_branch
    %9 = sbr.rel target = $region3
  $region8: #{striding_conv_subsampling.4} parent=0 // loop_exit
    _

// kernel: striding_conv_subsampling.5
$region0: #{striding_conv_subsampling.5}
  #allocation0 [shape = 'u32[]', space=smem, size = 0x4, offset = 0x4, fixed_abs, tag = 'smem constant byte address 0x4 - core index']
  #allocation1 [shape = 'u32[144,128]{1,0:T(1,128)}', space=vmem, size = 0x12000, scoped, tag = 'internal scratch']
  #allocation2 [shape = 'f32[16,128]{1,0:T(8,128)}', space=vmem, size = 0x2000, scoped, tag = 'scratch operand']
  %s0 = inlined_call_operand.vmem [shape: bf16[16,2048], index: 0, kind: input, shape index: {}]
  %s1 = inlined_call_operand.vmem [shape: bf16[2048,128], index: 1, kind: input, shape index: {}]
  %s2 = inlined_call_operand.vmem [shape: f32[1,128], index: 2, kind: input, shape index: {}]
  %s3 = inlined_call_operand.vmem [shape: f32[16,128], index: 3, kind: output, shape index: {}]
  %s4 = sld [smem:[#allocation0]]
  $region30: #{striding_conv_subsampling.5} parent=0
    _
  %s6 = ssub.s32 1, %s4
  %s7 = scalar_select 0, %s6, %s4
  // Predicated region
  $region2: #{striding_conv_subsampling.5} parent=0 // pred_check
    _
  $region3: #{striding_conv_subsampling.5} parent=0 // pred_check_branch
    %9 = sbr.rel (0) target = $region5
  $region4: #{striding_conv_subsampling.5} parent=0 // pred_region
    _
  $region5: #{striding_conv_subsampling.5} parent=0 // pred_fallthru
    _
  // Predicated region
  $region6: #{striding_conv_subsampling.5} parent=0 // pred_check
    _
  $region7: #{striding_conv_subsampling.5} parent=0 // pred_check_branch
    %11 = sbr.rel (0) target = $region9
  $region8: #{striding_conv_subsampling.5} parent=0 // pred_region
    _
  $region9: #{striding_conv_subsampling.5} parent=0 // pred_fallthru
    _
  // Predicated region
  $region10: #{striding_conv_subsampling.5} parent=0 // pred_check
    _
  $region11: #{striding_conv_subsampling.5} parent=0 // pred_check_branch
    %13 = sbr.rel (0) target = $region13
  $region12: #{striding_conv_subsampling.5} parent=0 // pred_region
    _
  $region13: #{striding_conv_subsampling.5} parent=0 // pred_fallthru
    _
  %p15 = scmp.eq.s32.totalorder 0, 0
  // Predicated region
  $region14: #{striding_conv_subsampling.5} parent=0 // pred_check
    %p16 = pneg %p15
  $region15: #{striding_conv_subsampling.5} parent=0 // pred_check_branch
    %18 = sbr.rel (%p16) target = $region17
  $region16: #{striding_conv_subsampling.5} parent=0 // pred_region
    %19 = vst [vmem:[#allocation2] sm:$0xff] 0.0
    %20 = vst [vmem:[#allocation2 + $0x8] sm:$0xff] 0.0
  $region17: #{striding_conv_subsampling.5} parent=0 // pred_fallthru
    _
  %v21 = vld [vmem:[#allocation2] sm:$0xff]
  %v22 = vld [vmem:[#allocation2 + $0x8] sm:$0xff]
  %v23 = vld [vmem:[%s0] sm:$0xff]
  %v24 = vld [vmem:[%s0 + $0x8] sm:$0xff]
  %v25 = vld [vmem:[%s0 + $0x10] sm:$0xff]
  %v26 = vld [vmem:[%s0 + $0x18] sm:$0xff]
  %v27 = vld [vmem:[%s0 + $0x20] sm:$0xff]
  %v28 = vld [vmem:[%s0 + $0x28] sm:$0xff]
  %v29 = vld [vmem:[%s0 + $0x30] sm:$0xff]
  %v30 = vld [vmem:[%s0 + $0x38] sm:$0xff]
  %v31 = vld [vmem:[%s0 + $0x40] sm:$0xff]
  %v32 = vld [vmem:[%s0 + $0x48] sm:$0xff]
  %v33 = vld [vmem:[%s0 + $0x50] sm:$0xff]
  %v34 = vld [vmem:[%s0 + $0x58] sm:$0xff]
  %v35 = vld [vmem:[%s0 + $0x60] sm:$0xff]
  %v36 = vld [vmem:[%s0 + $0x68] sm:$0xff]
  %v37 = vld [vmem:[%s0 + $0x70] sm:$0xff]
  %v38 = vld [vmem:[%s0 + $0x78] sm:$0xff]
  %v39 = vld [vmem:[%s1] sm:$0xf]
  %v40 = vld [vmem:[%s1 + $0x4] sm:$0xf]
  %v41 = vld [vmem:[%s1 + $0x8] sm:$0xf]
  %v42 = vld [vmem:[%s1 + $0xc] sm:$0xf]
  %v43 = vld [vmem:[%s1 + $0x10] sm:$0xf]
  %v44 = vld [vmem:[%s1 + $0x14] sm:$0xf]
  %v45 = vld [vmem:[%s1 + $0x18] sm:$0xf]
  %v46 = vld [vmem:[%s1 + $0x1c] sm:$0xf]
  %v47 = vld [vmem:[%s1 + $0x20] sm:$0xf]
  %v48 = vld [vmem:[%s1 + $0x24] sm:$0xf]
  %v49 = vld [vmem:[%s1 + $0x28] sm:$0xf]
  %v50 = vld [vmem:[%s1 + $0x2c] sm:$0xf]
  %v51 = vld [vmem:[%s1 + $0x30] sm:$0xf]
  %v52 = vld [vmem:[%s1 + $0x34] sm:$0xf]
  %v53 = vld [vmem:[%s1 + $0x38] sm:$0xf]
  %v54 = vld [vmem:[%s1 + $0x3c] sm:$0xf]
  %v55 = vld [vmem:[%s1 + $0x40] sm:$0xf]
  %v56 = vld [vmem:[%s1 + $0x44] sm:$0xf]
  %v57 = vld [vmem:[%s1 + $0x48] sm:$0xf]
  %v58 = vld [vmem:[%s1 + $0x4c] sm:$0xf]
  %v59 = vld [vmem:[%s1 + $0x50] sm:$0xf]
  %v60 = vld [vmem:[%s1 + $0x54] sm:$0xf]
  %v61 = vld [vmem:[%s1 + $0x58] sm:$0xf]
  %v62 = vld [vmem:[%s1 + $0x5c] sm:$0xf]
  %v63 = vld [vmem:[%s1 + $0x60] sm:$0xf]
  %v64 = vld [vmem:[%s1 + $0x64] sm:$0xf]
  %v65 = vld [vmem:[%s1 + $0x68] sm:$0xf]
  %v66 = vld [vmem:[%s1 + $0x6c] sm:$0xf]
  %v67 = vld [vmem:[%s1 + $0x70] sm:$0xf]
  %v68 = vld [vmem:[%s1 + $0x74] sm:$0xf]
  %v69 = vld [vmem:[%s1 + $0x78] sm:$0xf]
  %v70 = vld [vmem:[%s1 + $0x7c] sm:$0xf]
  %v71 = vld [vmem:[%s1 + $0x80] sm:$0xf]
  %v72 = vld [vmem:[%s1 + $0x84] sm:$0xf]
  %v73 = vld [vmem:[%s1 + $0x88] sm:$0xf]
  %v74 = vld [vmem:[%s1 + $0x8c] sm:$0xf]
  %v75 = vld [vmem:[%s1 + $0x90] sm:$0xf]
  %v76 = vld [vmem:[%s1 + $0x94] sm:$0xf]
  %v77 = vld [vmem:[%s1 + $0x98] sm:$0xf]
  %v78 = vld [vmem:[%s1 + $0x9c] sm:$0xf]
  %v79 = vld [vmem:[%s1 + $0xa0] sm:$0xf]
  %v80 = vld [vmem:[%s1 + $0xa4] sm:$0xf]
  %v81 = vld [vmem:[%s1 + $0xa8] sm:$0xf]
  %v82 = vld [vmem:[%s1 + $0xac] sm:$0xf]
  %v83 = vld [vmem:[%s1 + $0xb0] sm:$0xf]
  %v84 = vld [vmem:[%s1 + $0xb4] sm:$0xf]
  %v85 = vld [vmem:[%s1 + $0xb8] sm:$0xf]
  %v86 = vld [vmem:[%s1 + $0xbc] sm:$0xf]
  %v87 = vld [vmem:[%s1 + $0xc0] sm:$0xf]
  %v88 = vld [vmem:[%s1 + $0xc4] sm:$0xf]
  %v89 = vld [vmem:[%s1 + $0xc8] sm:$0xf]
  %v90 = vld [vmem:[%s1 + $0xcc] sm:$0xf]
  %v91 = vld [vmem:[%s1 + $0xd0] sm:$0xf]
  %v92 = vld [vmem:[%s1 + $0xd4] sm:$0xf]
  %v93 = vld [vmem:[%s1 + $0xd8] sm:$0xf]
  %v94 = vld [vmem:[%s1 + $0xdc] sm:$0xf]
  %v95 = vld [vmem:[%s1 + $0xe0] sm:$0xf]
  %v96 = vld [vmem:[%s1 + $0xe4] sm:$0xf]
  %v97 = vld [vmem:[%s1 + $0xe8] sm:$0xf]
  %v98 = vld [vmem:[%s1 + $0xec] sm:$0xf]
  %v99 = vld [vmem:[%s1 + $0xf0] sm:$0xf]
  %v100 = vld [vmem:[%s1 + $0xf4] sm:$0xf]
  %v101 = vld [vmem:[%s1 + $0xf8] sm:$0xf]
  %v102 = vld [vmem:[%s1 + $0xfc] sm:$0xf]
  %v103 = vld [vmem:[%s1 + $0x100] sm:$0xf]
  %v104 = vld [vmem:[%s1 + $0x104] sm:$0xf]
  %v105 = vld [vmem:[%s1 + $0x108] sm:$0xf]
  %v106 = vld [vmem:[%s1 + $0x10c] sm:$0xf]
  %v107 = vld [vmem:[%s1 + $0x110] sm:$0xf]
  %v108 = vld [vmem:[%s1 + $0x114] sm:$0xf]
  %v109 = vld [vmem:[%s1 + $0x118] sm:$0xf]
  %v110 = vld [vmem:[%s1 + $0x11c] sm:$0xf]
  %v111 = vld [vmem:[%s1 + $0x120] sm:$0xf]
  %v112 = vld [vmem:[%s1 + $0x124] sm:$0xf]
  %v113 = vld [vmem:[%s1 + $0x128] sm:$0xf]
  %v114 = vld [vmem:[%s1 + $0x12c] sm:$0xf]
  %v115 = vld [vmem:[%s1 + $0x130] sm:$0xf]
  %v116 = vld [vmem:[%s1 + $0x134] sm:$0xf]
  %v117 = vld [vmem:[%s1 + $0x138] sm:$0xf]
  %v118 = vld [vmem:[%s1 + $0x13c] sm:$0xf]
  %v119 = vld [vmem:[%s1 + $0x140] sm:$0xf]
  %v120 = vld [vmem:[%s1 + $0x144] sm:$0xf]
  %v121 = vld [vmem:[%s1 + $0x148] sm:$0xf]
  %v122 = vld [vmem:[%s1 + $0x14c] sm:$0xf]
  %v123 = vld [vmem:[%s1 + $0x150] sm:$0xf]
  %v124 = vld [vmem:[%s1 + $0x154] sm:$0xf]
  %v125 = vld [vmem:[%s1 + $0x158] sm:$0xf]
  %v126 = vld [vmem:[%s1 + $0x15c] sm:$0xf]
  %v127 = vld [vmem:[%s1 + $0x160] sm:$0xf]
  %v128 = vld [vmem:[%s1 + $0x164] sm:$0xf]
  %v129 = vld [vmem:[%s1 + $0x168] sm:$0xf]
  %v130 = vld [vmem:[%s1 + $0x16c] sm:$0xf]
  %v131 = vld [vmem:[%s1 + $0x170] sm:$0xf]
  %v132 = vld [vmem:[%s1 + $0x174] sm:$0xf]
  %v133 = vld [vmem:[%s1 + $0x178] sm:$0xf]
  %v134 = vld [vmem:[%s1 + $0x17c] sm:$0xf]
  %v135 = vld [vmem:[%s1 + $0x180] sm:$0xf]
  %v136 = vld [vmem:[%s1 + $0x184] sm:$0xf]
  %v137 = vld [vmem:[%s1 + $0x188] sm:$0xf]
  %v138 = vld [vmem:[%s1 + $0x18c] sm:$0xf]
  %v139 = vld [vmem:[%s1 + $0x190] sm:$0xf]
  %v140 = vld [vmem:[%s1 + $0x194] sm:$0xf]
  %v141 = vld [vmem:[%s1 + $0x198] sm:$0xf]
  %v142 = vld [vmem:[%s1 + $0x19c] sm:$0xf]
  %v143 = vld [vmem:[%s1 + $0x1a0] sm:$0xf]
  %v144 = vld [vmem:[%s1 + $0x1a4] sm:$0xf]
  %v145 = vld [vmem:[%s1 + $0x1a8] sm:$0xf]
  %v146 = vld [vmem:[%s1 + $0x1ac] sm:$0xf]
  %v147 = vld [vmem:[%s1 + $0x1b0] sm:$0xf]
  %v148 = vld [vmem:[%s1 + $0x1b4] sm:$0xf]
  %v149 = vld [vmem:[%s1 + $0x1b8] sm:$0xf]
  %v150 = vld [vmem:[%s1 + $0x1bc] sm:$0xf]
  %v151 = vld [vmem:[%s1 + $0x1c0] sm:$0xf]
  %v152 = vld [vmem:[%s1 + $0x1c4] sm:$0xf]
  %v153 = vld [vmem:[%s1 + $0x1c8] sm:$0xf]
  %v154 = vld [vmem:[%s1 + $0x1cc] sm:$0xf]
  %v155 = vld [vmem:[%s1 + $0x1d0] sm:$0xf]
  %v156 = vld [vmem:[%s1 + $0x1d4] sm:$0xf]
  %v157 = vld [vmem:[%s1 + $0x1d8] sm:$0xf]
  %v158 = vld [vmem:[%s1 + $0x1dc] sm:$0xf]
  %v159 = vld [vmem:[%s1 + $0x1e0] sm:$0xf]
  %v160 = vld [vmem:[%s1 + $0x1e4] sm:$0xf]
  %v161 = vld [vmem:[%s1 + $0x1e8] sm:$0xf]
  %v162 = vld [vmem:[%s1 + $0x1ec] sm:$0xf]
  %v163 = vld [vmem:[%s1 + $0x1f0] sm:$0xf]
  %v164 = vld [vmem:[%s1 + $0x1f4] sm:$0xf]
  %v165 = vld [vmem:[%s1 + $0x1f8] sm:$0xf]
  %v166 = vld [vmem:[%s1 + $0x1fc] sm:$0xf]
  %v167 = vld [vmem:[%s1 + $0x200] sm:$0xf]
  %v168 = vld [vmem:[%s1 + $0x204] sm:$0xf]
  %v169 = vld [vmem:[%s1 + $0x208] sm:$0xf]
  %v170 = vld [vmem:[%s1 + $0x20c] sm:$0xf]
  %v171 = vld [vmem:[%s1 + $0x210] sm:$0xf]
  %v172 = vld [vmem:[%s1 + $0x214] sm:$0xf]
  %v173 = vld [vmem:[%s1 + $0x218] sm:$0xf]
  %v174 = vld [vmem:[%s1 + $0x21c] sm:$0xf]
  %v175 = vld [vmem:[%s1 + $0x220] sm:$0xf]
  %v176 = vld [vmem:[%s1 + $0x224] sm:$0xf]
  %v177 = vld [vmem:[%s1 + $0x228] sm:$0xf]
  %v178 = vld [vmem:[%s1 + $0x22c] sm:$0xf]
  %v179 = vld [vmem:[%s1 + $0x230] sm:$0xf]
  %v180 = vld [vmem:[%s1 + $0x234] sm:$0xf]
  %v181 = vld [vmem:[%s1 + $0x238] sm:$0xf]
  %v182 = vld [vmem:[%s1 + $0x23c] sm:$0xf]
  %v183 = vld [vmem:[%s1 + $0x240] sm:$0xf]
  %v184 = vld [vmem:[%s1 + $0x244] sm:$0xf]
  %v185 = vld [vmem:[%s1 + $0x248] sm:$0xf]
  %v186 = vld [vmem:[%s1 + $0x24c] sm:$0xf]
  %v187 = vld [vmem:[%s1 + $0x250] sm:$0xf]
  %v188 = vld [vmem:[%s1 + $0x254] sm:$0xf]
  %v189 = vld [vmem:[%s1 + $0x258] sm:$0xf]
  %v190 = vld [vmem:[%s1 + $0x25c] sm:$0xf]
  %v191 = vld [vmem:[%s1 + $0x260] sm:$0xf]
  %v192 = vld [vmem:[%s1 + $0x264] sm:$0xf]
  %v193 = vld [vmem:[%s1 + $0x268] sm:$0xf]
  %v194 = vld [vmem:[%s1 + $0x26c] sm:$0xf]
  %v195 = vld [vmem:[%s1 + $0x270] sm:$0xf]
  %v196 = vld [vmem:[%s1 + $0x274] sm:$0xf]
  %v197 = vld [vmem:[%s1 + $0x278] sm:$0xf]
  %v198 = vld [vmem:[%s1 + $0x27c] sm:$0xf]
  %v199 = vld [vmem:[%s1 + $0x280] sm:$0xf]
  %v200 = vld [vmem:[%s1 + $0x284] sm:$0xf]
  %v201 = vld [vmem:[%s1 + $0x288] sm:$0xf]
  %v202 = vld [vmem:[%s1 + $0x28c] sm:$0xf]
  %v203 = vld [vmem:[%s1 + $0x290] sm:$0xf]
  %v204 = vld [vmem:[%s1 + $0x294] sm:$0xf]
  %v205 = vld [vmem:[%s1 + $0x298] sm:$0xf]
  %v206 = vld [vmem:[%s1 + $0x29c] sm:$0xf]
  %v207 = vld [vmem:[%s1 + $0x2a0] sm:$0xf]
  %v208 = vld [vmem:[%s1 + $0x2a4] sm:$0xf]
  %v209 = vld [vmem:[%s1 + $0x2a8] sm:$0xf]
  %v210 = vld [vmem:[%s1 + $0x2ac] sm:$0xf]
  %v211 = vld [vmem:[%s1 + $0x2b0] sm:$0xf]
  %v212 = vld [vmem:[%s1 + $0x2b4] sm:$0xf]
  %v213 = vld [vmem:[%s1 + $0x2b8] sm:$0xf]
  %v214 = vld [vmem:[%s1 + $0x2bc] sm:$0xf]
  %v215 = vld [vmem:[%s1 + $0x2c0] sm:$0xf]
  %v216 = vld [vmem:[%s1 + $0x2c4] sm:$0xf]
  %v217 = vld [vmem:[%s1 + $0x2c8] sm:$0xf]
  %v218 = vld [vmem:[%s1 + $0x2cc] sm:$0xf]
  %v219 = vld [vmem:[%s1 + $0x2d0] sm:$0xf]
  %v220 = vld [vmem:[%s1 + $0x2d4] sm:$0xf]
  %v221 = vld [vmem:[%s1 + $0x2d8] sm:$0xf]
  %v222 = vld [vmem:[%s1 + $0x2dc] sm:$0xf]
  %v223 = vld [vmem:[%s1 + $0x2e0] sm:$0xf]
  %v224 = vld [vmem:[%s1 + $0x2e4] sm:$0xf]
  %v225 = vld [vmem:[%s1 + $0x2e8] sm:$0xf]
  %v226 = vld [vmem:[%s1 + $0x2ec] sm:$0xf]
  %v227 = vld [vmem:[%s1 + $0x2f0] sm:$0xf]
  %v228 = vld [vmem:[%s1 + $0x2f4] sm:$0xf]
  %v229 = vld [vmem:[%s1 + $0x2f8] sm:$0xf]
  %v230 = vld [vmem:[%s1 + $0x2fc] sm:$0xf]
  %v231 = vld [vmem:[%s1 + $0x300] sm:$0xf]
  %v232 = vld [vmem:[%s1 + $0x304] sm:$0xf]
  %v233 = vld [vmem:[%s1 + $0x308] sm:$0xf]
  %v234 = vld [vmem:[%s1 + $0x30c] sm:$0xf]
  %v235 = vld [vmem:[%s1 + $0x310] sm:$0xf]
  %v236 = vld [vmem:[%s1 + $0x314] sm:$0xf]
  %v237 = vld [vmem:[%s1 + $0x318] sm:$0xf]
  %v238 = vld [vmem:[%s1 + $0x31c] sm:$0xf]
  %v239 = vld [vmem:[%s1 + $0x320] sm:$0xf]
  %v240 = vld [vmem:[%s1 + $0x324] sm:$0xf]
  %v241 = vld [vmem:[%s1 + $0x328] sm:$0xf]
  %v242 = vld [vmem:[%s1 + $0x32c] sm:$0xf]
  %v243 = vld [vmem:[%s1 + $0x330] sm:$0xf]
  %v244 = vld [vmem:[%s1 + $0x334] sm:$0xf]
  %v245 = vld [vmem:[%s1 + $0x338] sm:$0xf]
  %v246 = vld [vmem:[%s1 + $0x33c] sm:$0xf]
  %v247 = vld [vmem:[%s1 + $0x340] sm:$0xf]
  %v248 = vld [vmem:[%s1 + $0x344] sm:$0xf]
  %v249 = vld [vmem:[%s1 + $0x348] sm:$0xf]
  %v250 = vld [vmem:[%s1 + $0x34c] sm:$0xf]
  %v251 = vld [vmem:[%s1 + $0x350] sm:$0xf]
  %v252 = vld [vmem:[%s1 + $0x354] sm:$0xf]
  %v253 = vld [vmem:[%s1 + $0x358] sm:$0xf]
  %v254 = vld [vmem:[%s1 + $0x35c] sm:$0xf]
  %v255 = vld [vmem:[%s1 + $0x360] sm:$0xf]
  %v256 = vld [vmem:[%s1 + $0x364] sm:$0xf]
  %v257 = vld [vmem:[%s1 + $0x368] sm:$0xf]
  %v258 = vld [vmem:[%s1 + $0x36c] sm:$0xf]
  %v259 = vld [vmem:[%s1 + $0x370] sm:$0xf]
  %v260 = vld [vmem:[%s1 + $0x374] sm:$0xf]
  %v261 = vld [vmem:[%s1 + $0x378] sm:$0xf]
  %v262 = vld [vmem:[%s1 + $0x37c] sm:$0xf]
  %v263 = vld [vmem:[%s1 + $0x380] sm:$0xf]
  %v264 = vld [vmem:[%s1 + $0x384] sm:$0xf]
  %v265 = vld [vmem:[%s1 + $0x388] sm:$0xf]
  %v266 = vld [vmem:[%s1 + $0x38c] sm:$0xf]
  %v267 = vld [vmem:[%s1 + $0x390] sm:$0xf]
  %v268 = vld [vmem:[%s1 + $0x394] sm:$0xf]
  %v269 = vld [vmem:[%s1 + $0x398] sm:$0xf]
  %v270 = vld [vmem:[%s1 + $0x39c] sm:$0xf]
  %v271 = vld [vmem:[%s1 + $0x3a0] sm:$0xf]
  %v272 = vld [vmem:[%s1 + $0x3a4] sm:$0xf]
  %v273 = vld [vmem:[%s1 + $0x3a8] sm:$0xf]
  %v274 = vld [vmem:[%s1 + $0x3ac] sm:$0xf]
  %v275 = vld [vmem:[%s1 + $0x3b0] sm:$0xf]
  %v276 = vld [vmem:[%s1 + $0x3b4] sm:$0xf]
  %v277 = vld [vmem:[%s1 + $0x3b8] sm:$0xf]
  %v278 = vld [vmem:[%s1 + $0x3bc] sm:$0xf]
  %v279 = vld [vmem:[%s1 + $0x3c0] sm:$0xf]
  %v280 = vld [vmem:[%s1 + $0x3c4] sm:$0xf]
  %v281 = vld [vmem:[%s1 + $0x3c8] sm:$0xf]
  %v282 = vld [vmem:[%s1 + $0x3cc] sm:$0xf]
  %v283 = vld [vmem:[%s1 + $0x3d0] sm:$0xf]
  %v284 = vld [vmem:[%s1 + $0x3d4] sm:$0xf]
  %v285 = vld [vmem:[%s1 + $0x3d8] sm:$0xf]
  %v286 = vld [vmem:[%s1 + $0x3dc] sm:$0xf]
  %v287 = vld [vmem:[%s1 + $0x3e0] sm:$0xf]
  %v288 = vld [vmem:[%s1 + $0x3e4] sm:$0xf]
  %v289 = vld [vmem:[%s1 + $0x3e8] sm:$0xf]
  %v290 = vld [vmem:[%s1 + $0x3ec] sm:$0xf]
  %v291 = vld [vmem:[%s1 + $0x3f0] sm:$0xf]
  %v292 = vld [vmem:[%s1 + $0x3f4] sm:$0xf]
  %v293 = vld [vmem:[%s1 + $0x3f8] sm:$0xf]
  %v294 = vld [vmem:[%s1 + $0x3fc] sm:$0xf]
  %v311 = vunpack.c.l.b16 %v23
  %v312 = vunpack.c.h.b16 %v23
  %v313 = vunpack.c.l.b16 %v24
  %v314 = vunpack.c.h.b16 %v24
  %v315 = vunpack.c.l.b16 %v25
  %v316 = vunpack.c.h.b16 %v25
  %v317 = vunpack.c.l.b16 %v26
  %v318 = vunpack.c.h.b16 %v26
  %v319 = vunpack.c.l.b16 %v27
  %v320 = vunpack.c.h.b16 %v27
  %v321 = vunpack.c.l.b16 %v28
  %v322 = vunpack.c.h.b16 %v28
  %v323 = vunpack.c.l.b16 %v29
  %v324 = vunpack.c.h.b16 %v29
  %v325 = vunpack.c.l.b16 %v30
  %v326 = vunpack.c.h.b16 %v30
  %v327 = vunpack.c.l.b16 %v31
  %v328 = vunpack.c.h.b16 %v31
  %v329 = vunpack.c.l.b16 %v32
  %v330 = vunpack.c.h.b16 %v32
  %v331 = vunpack.c.l.b16 %v33
  %v332 = vunpack.c.h.b16 %v33
  %v333 = vunpack.c.l.b16 %v34
  %v334 = vunpack.c.h.b16 %v34
  %v335 = vunpack.c.l.b16 %v35
  %v336 = vunpack.c.h.b16 %v35
  %v337 = vunpack.c.l.b16 %v36
  %v338 = vunpack.c.h.b16 %v36
  %v339 = vunpack.c.l.b16 %v37
  %v340 = vunpack.c.h.b16 %v37
  %v341 = vunpack.c.l.b16 %v38
  %v342 = vunpack.c.h.b16 %v38
  %v343 = vpack.c.b16 %v327, %v311
  %v344 = vpack.c.b16 %v328, %v312
  %v345 = vpack.c.b16 %v329, %v313
  %v346 = vpack.c.b16 %v330, %v314
  %v347 = vpack.c.b16 %v331, %v315
  %v348 = vpack.c.b16 %v332, %v316
  %v349 = vpack.c.b16 %v333, %v317
  %v350 = vpack.c.b16 %v334, %v318
  %v351 = vpack.c.b16 %v335, %v319
  %v352 = vpack.c.b16 %v336, %v320
  %v353 = vpack.c.b16 %v337, %v321
  %v354 = vpack.c.b16 %v338, %v322
  %v355 = vpack.c.b16 %v339, %v323
  %v356 = vpack.c.b16 %v340, %v324
  %v357 = vpack.c.b16 %v341, %v325
  %v358 = vpack.c.b16 %v342, %v326
  %v631 = vunpack.c.l.b16 %v39
  %v632 = vunpack.c.l.b16 %v40
  %v633 = vunpack.c.l.b16 %v41
  %v634 = vunpack.c.l.b16 %v42
  %v635 = vunpack.c.l.b16 %v43
  %v636 = vunpack.c.l.b16 %v44
  %v637 = vunpack.c.l.b16 %v45
  %v638 = vunpack.c.l.b16 %v46
  %v639 = vunpack.c.l.b16 %v47
  %v640 = vunpack.c.l.b16 %v48
  %v641 = vunpack.c.l.b16 %v49
  %v642 = vunpack.c.l.b16 %v50
  %v643 = vunpack.c.l.b16 %v51
  %v644 = vunpack.c.l.b16 %v52
  %v645 = vunpack.c.l.b16 %v53
  %v646 = vunpack.c.l.b16 %v54
  %v647 = vunpack.c.l.b16 %v55
  %v648 = vunpack.c.l.b16 %v56
  %v649 = vunpack.c.l.b16 %v57
  %v650 = vunpack.c.l.b16 %v58
  %v651 = vunpack.c.l.b16 %v59
  %v652 = vunpack.c.l.b16 %v60
  %v653 = vunpack.c.l.b16 %v61
  %v654 = vunpack.c.l.b16 %v62
  %v655 = vunpack.c.l.b16 %v63
  %v656 = vunpack.c.l.b16 %v64
  %v657 = vunpack.c.l.b16 %v65
  %v658 = vunpack.c.l.b16 %v66
  %v659 = vunpack.c.l.b16 %v67
  %v660 = vunpack.c.l.b16 %v68
  %v661 = vunpack.c.l.b16 %v69
  %v662 = vunpack.c.l.b16 %v70
  %v663 = vunpack.c.l.b16 %v71
  %v664 = vunpack.c.l.b16 %v72
  %v665 = vunpack.c.l.b16 %v73
  %v666 = vunpack.c.l.b16 %v74
  %v667 = vunpack.c.l.b16 %v75
  %v668 = vunpack.c.l.b16 %v76
  %v669 = vunpack.c.l.b16 %v77
  %v670 = vunpack.c.l.b16 %v78
  %v671 = vunpack.c.l.b16 %v79
  %v672 = vunpack.c.l.b16 %v80
  %v673 = vunpack.c.l.b16 %v81
  %v674 = vunpack.c.l.b16 %v82
  %v675 = vunpack.c.l.b16 %v83
  %v676 = vunpack.c.l.b16 %v84
  %v677 = vunpack.c.l.b16 %v85
  %v678 = vunpack.c.l.b16 %v86
  %v679 = vunpack.c.l.b16 %v87
  %v680 = vunpack.c.l.b16 %v88
  %v681 = vunpack.c.l.b16 %v89
  %v682 = vunpack.c.l.b16 %v90
  %v683 = vunpack.c.l.b16 %v91
  %v684 = vunpack.c.l.b16 %v92
  %v685 = vunpack.c.l.b16 %v93
  %v686 = vunpack.c.l.b16 %v94
  %v687 = vunpack.c.l.b16 %v95
  %v688 = vunpack.c.l.b16 %v96
  %v689 = vunpack.c.l.b16 %v97
  %v690 = vunpack.c.l.b16 %v98
  %v691 = vunpack.c.l.b16 %v99
  %v692 = vunpack.c.l.b16 %v100
  %v693 = vunpack.c.l.b16 %v101
  %v694 = vunpack.c.l.b16 %v102
  %v695 = vunpack.c.l.b16 %v103
  %v696 = vunpack.c.l.b16 %v104
  %v697 = vunpack.c.l.b16 %v105
  %v698 = vunpack.c.l.b16 %v106
  %v699 = vunpack.c.l.b16 %v107
  %v700 = vunpack.c.l.b16 %v108
  %v701 = vunpack.c.l.b16 %v109
  %v702 = vunpack.c.l.b16 %v110
  %v703 = vunpack.c.l.b16 %v111
  %v704 = vunpack.c.l.b16 %v112
  %v705 = vunpack.c.l.b16 %v113
  %v706 = vunpack.c.l.b16 %v114
  %v707 = vunpack.c.l.b16 %v115
  %v708 = vunpack.c.l.b16 %v116
  %v709 = vunpack.c.l.b16 %v117
  %v710 = vunpack.c.l.b16 %v118
  %v711 = vunpack.c.l.b16 %v119
  %v712 = vunpack.c.l.b16 %v120
  %v713 = vunpack.c.l.b16 %v121
  %v714 = vunpack.c.l.b16 %v122
  %v715 = vunpack.c.l.b16 %v123
  %v716 = vunpack.c.l.b16 %v124
  %v717 = vunpack.c.l.b16 %v125
  %v718 = vunpack.c.l.b16 %v126
  %v719 = vunpack.c.l.b16 %v127
  %v720 = vunpack.c.l.b16 %v128
  %v721 = vunpack.c.l.b16 %v129
  %v722 = vunpack.c.l.b16 %v130
  %v723 = vunpack.c.l.b16 %v131
  %v724 = vunpack.c.l.b16 %v132
  %v725 = vunpack.c.l.b16 %v133
  %v726 = vunpack.c.l.b16 %v134
  %v727 = vunpack.c.l.b16 %v135
  %v728 = vunpack.c.l.b16 %v136
  %v729 = vunpack.c.l.b16 %v137
  %v730 = vunpack.c.l.b16 %v138
  %v731 = vunpack.c.l.b16 %v139
  %v732 = vunpack.c.l.b16 %v140
  %v733 = vunpack.c.l.b16 %v141
  %v734 = vunpack.c.l.b16 %v142
  %v735 = vunpack.c.l.b16 %v143
  %v736 = vunpack.c.l.b16 %v144
  %v737 = vunpack.c.l.b16 %v145
  %v738 = vunpack.c.l.b16 %v146
  %v739 = vunpack.c.l.b16 %v147
  %v740 = vunpack.c.l.b16 %v148
  %v741 = vunpack.c.l.b16 %v149
  %v742 = vunpack.c.l.b16 %v150
  %v743 = vunpack.c.l.b16 %v151
  %v744 = vunpack.c.l.b16 %v152
  %v745 = vunpack.c.l.b16 %v153
  %v746 = vunpack.c.l.b16 %v154
  %v747 = vunpack.c.l.b16 %v155
  %v748 = vunpack.c.l.b16 %v156
  %v749 = vunpack.c.l.b16 %v157
  %v750 = vunpack.c.l.b16 %v158
  %v751 = vunpack.c.l.b16 %v159
  %v752 = vunpack.c.l.b16 %v160
  %v753 = vunpack.c.l.b16 %v161
  %v754 = vunpack.c.l.b16 %v162
  %v755 = vunpack.c.l.b16 %v163
  %v756 = vunpack.c.l.b16 %v164
  %v757 = vunpack.c.l.b16 %v165
  %v758 = vunpack.c.l.b16 %v166
  %v759 = vunpack.c.l.b16 %v167
  %v760 = vunpack.c.l.b16 %v168
  %v761 = vunpack.c.l.b16 %v169
  %v762 = vunpack.c.l.b16 %v170
  %v763 = vunpack.c.l.b16 %v171
  %v764 = vunpack.c.l.b16 %v172
  %v765 = vunpack.c.l.b16 %v173
  %v766 = vunpack.c.l.b16 %v174
  %v767 = vunpack.c.l.b16 %v175
  %v768 = vunpack.c.l.b16 %v176
  %v769 = vunpack.c.l.b16 %v177
  %v770 = vunpack.c.l.b16 %v178
  %v771 = vunpack.c.l.b16 %v179
  %v772 = vunpack.c.l.b16 %v180
  %v773 = vunpack.c.l.b16 %v181
  %v774 = vunpack.c.l.b16 %v182
  %v775 = vunpack.c.l.b16 %v183
  %v776 = vunpack.c.l.b16 %v184
  %v777 = vunpack.c.l.b16 %v185
  %v778 = vunpack.c.l.b16 %v186
  %v779 = vunpack.c.l.b16 %v187
  %v780 = vunpack.c.l.b16 %v188
  %v781 = vunpack.c.l.b16 %v189
  %v782 = vunpack.c.l.b16 %v190
  %v783 = vunpack.c.l.b16 %v191
  %v784 = vunpack.c.l.b16 %v192
  %v785 = vunpack.c.l.b16 %v193
  %v786 = vunpack.c.l.b16 %v194
  %v787 = vunpack.c.l.b16 %v195
  %v788 = vunpack.c.l.b16 %v196
  %v789 = vunpack.c.l.b16 %v197
  %v790 = vunpack.c.l.b16 %v198
  %v791 = vunpack.c.l.b16 %v199
  %v792 = vunpack.c.l.b16 %v200
  %v793 = vunpack.c.l.b16 %v201
  %v794 = vunpack.c.l.b16 %v202
  %v795 = vunpack.c.l.b16 %v203
  %v796 = vunpack.c.l.b16 %v204
  %v797 = vunpack.c.l.b16 %v205
  %v798 = vunpack.c.l.b16 %v206
  %v799 = vunpack.c.l.b16 %v207
  %v800 = vunpack.c.l.b16 %v208
  %v801 = vunpack.c.l.b16 %v209
  %v802 = vunpack.c.l.b16 %v210
  %v803 = vunpack.c.l.b16 %v211
  %v804 = vunpack.c.l.b16 %v212
  %v805 = vunpack.c.l.b16 %v213
  %v806 = vunpack.c.l.b16 %v214
  %v807 = vunpack.c.l.b16 %v215
  %v808 = vunpack.c.l.b16 %v216
  %v809 = vunpack.c.l.b16 %v217
  %v810 = vunpack.c.l.b16 %v218
  %v811 = vunpack.c.l.b16 %v219
  %v812 = vunpack.c.l.b16 %v220
  %v813 = vunpack.c.l.b16 %v221
  %v814 = vunpack.c.l.b16 %v222
  %v815 = vunpack.c.l.b16 %v223
  %v816 = vunpack.c.l.b16 %v224
  %v817 = vunpack.c.l.b16 %v225
  %v818 = vunpack.c.l.b16 %v226
  %v819 = vunpack.c.l.b16 %v227
  %v820 = vunpack.c.l.b16 %v228
  %v821 = vunpack.c.l.b16 %v229
  %v822 = vunpack.c.l.b16 %v230
  %v823 = vunpack.c.l.b16 %v231
  %v824 = vunpack.c.l.b16 %v232
  %v825 = vunpack.c.l.b16 %v233
  %v826 = vunpack.c.l.b16 %v234
  %v827 = vunpack.c.l.b16 %v235
  %v828 = vunpack.c.l.b16 %v236
  %v829 = vunpack.c.l.b16 %v237
  %v830 = vunpack.c.l.b16 %v238
  %v831 = vunpack.c.l.b16 %v239
  %v832 = vunpack.c.l.b16 %v240
  %v833 = vunpack.c.l.b16 %v241
  %v834 = vunpack.c.l.b16 %v242
  %v835 = vunpack.c.l.b16 %v243
  %v836 = vunpack.c.l.b16 %v244
  %v837 = vunpack.c.l.b16 %v245
  %v838 = vunpack.c.l.b16 %v246
  %v839 = vunpack.c.l.b16 %v247
  %v840 = vunpack.c.l.b16 %v248
  %v841 = vunpack.c.l.b16 %v249
  %v842 = vunpack.c.l.b16 %v250
  %v843 = vunpack.c.l.b16 %v251
  %v844 = vunpack.c.l.b16 %v252
  %v845 = vunpack.c.l.b16 %v253
  %v846 = vunpack.c.l.b16 %v254
  %v847 = vunpack.c.l.b16 %v255
  %v848 = vunpack.c.l.b16 %v256
  %v849 = vunpack.c.l.b16 %v257
  %v850 = vunpack.c.l.b16 %v258
  %v851 = vunpack.c.l.b16 %v259
  %v852 = vunpack.c.l.b16 %v260
  %v853 = vunpack.c.l.b16 %v261
  %v854 = vunpack.c.l.b16 %v262
  %v855 = vunpack.c.l.b16 %v263
  %v856 = vunpack.c.l.b16 %v264
  %v857 = vunpack.c.l.b16 %v265
  %v858 = vunpack.c.l.b16 %v266
  %v859 = vunpack.c.l.b16 %v267
  %v860 = vunpack.c.l.b16 %v268
  %v861 = vunpack.c.l.b16 %v269
  %v862 = vunpack.c.l.b16 %v270
  %v863 = vunpack.c.l.b16 %v271
  %v864 = vunpack.c.l.b16 %v272
  %v865 = vunpack.c.l.b16 %v273
  %v866 = vunpack.c.l.b16 %v274
  %v867 = vunpack.c.l.b16 %v275
  %v868 = vunpack.c.l.b16 %v276
  %v869 = vunpack.c.l.b16 %v277
  %v870 = vunpack.c.l.b16 %v278
  %v871 = vunpack.c.l.b16 %v279
  %v872 = vunpack.c.l.b16 %v280
  %v873 = vunpack.c.l.b16 %v281
  %v874 = vunpack.c.l.b16 %v282
  %v875 = vunpack.c.l.b16 %v283
  %v876 = vunpack.c.l.b16 %v284
  %v877 = vunpack.c.l.b16 %v285
  %v878 = vunpack.c.l.b16 %v286
  %v879 = vunpack.c.l.b16 %v287
  %v880 = vunpack.c.l.b16 %v288
  %v881 = vunpack.c.l.b16 %v289
  %v882 = vunpack.c.l.b16 %v290
  %v883 = vunpack.c.l.b16 %v291
  %v884 = vunpack.c.l.b16 %v292
  %v885 = vunpack.c.l.b16 %v293
  %v886 = vunpack.c.l.b16 %v294
  %v887 = vpack.c.b16 %v632, %v631
  %v888 = vpack.c.b16 %v634, %v633
  %v889 = vpack.c.b16 %v636, %v635
  %v890 = vpack.c.b16 %v638, %v637
  %v891 = vpack.c.b16 %v640, %v639
  %v892 = vpack.c.b16 %v642, %v641
  %v893 = vpack.c.b16 %v644, %v643
  %v894 = vpack.c.b16 %v646, %v645
  %v895 = vpack.c.b16 %v648, %v647
  %v896 = vpack.c.b16 %v650, %v649
  %v897 = vpack.c.b16 %v652, %v651
  %v898 = vpack.c.b16 %v654, %v653
  %v899 = vpack.c.b16 %v656, %v655
  %v900 = vpack.c.b16 %v658, %v657
  %v901 = vpack.c.b16 %v660, %v659
  %v902 = vpack.c.b16 %v662, %v661
  %v903 = vpack.c.b16 %v664, %v663
  %v904 = vpack.c.b16 %v666, %v665
  %v905 = vpack.c.b16 %v668, %v667
  %v906 = vpack.c.b16 %v670, %v669
  %v907 = vpack.c.b16 %v672, %v671
  %v908 = vpack.c.b16 %v674, %v673
  %v909 = vpack.c.b16 %v676, %v675
  %v910 = vpack.c.b16 %v678, %v677
  %v911 = vpack.c.b16 %v680, %v679
  %v912 = vpack.c.b16 %v682, %v681
  %v913 = vpack.c.b16 %v684, %v683
  %v914 = vpack.c.b16 %v686, %v685
  %v915 = vpack.c.b16 %v688, %v687
  %v916 = vpack.c.b16 %v690, %v689
  %v917 = vpack.c.b16 %v692, %v691
  %v918 = vpack.c.b16 %v694, %v693
  %v919 = vpack.c.b16 %v696, %v695
  %v920 = vpack.c.b16 %v698, %v697
  %v921 = vpack.c.b16 %v700, %v699
  %v922 = vpack.c.b16 %v702, %v701
  %v923 = vpack.c.b16 %v704, %v703
  %v924 = vpack.c.b16 %v706, %v705
  %v925 = vpack.c.b16 %v708, %v707
  %v926 = vpack.c.b16 %v710, %v709
  %v927 = vpack.c.b16 %v712, %v711
  %v928 = vpack.c.b16 %v714, %v713
  %v929 = vpack.c.b16 %v716, %v715
  %v930 = vpack.c.b16 %v718, %v717
  %v931 = vpack.c.b16 %v720, %v719
  %v932 = vpack.c.b16 %v722, %v721
  %v933 = vpack.c.b16 %v724, %v723
  %v934 = vpack.c.b16 %v726, %v725
  %v935 = vpack.c.b16 %v728, %v727
  %v936 = vpack.c.b16 %v730, %v729
  %v937 = vpack.c.b16 %v732, %v731
  %v938 = vpack.c.b16 %v734, %v733
  %v939 = vpack.c.b16 %v736, %v735
  %v940 = vpack.c.b16 %v738, %v737
  %v941 = vpack.c.b16 %v740, %v739
  %v942 = vpack.c.b16 %v742, %v741
  %v943 = vpack.c.b16 %v744, %v743
  %v944 = vpack.c.b16 %v746, %v745
  %v945 = vpack.c.b16 %v748, %v747
  %v946 = vpack.c.b16 %v750, %v749
  %v947 = vpack.c.b16 %v752, %v751
  %v948 = vpack.c.b16 %v754, %v753
  %v949 = vpack.c.b16 %v756, %v755
  %v950 = vpack.c.b16 %v758, %v757
  %v951 = vpack.c.b16 %v760, %v759
  %v952 = vpack.c.b16 %v762, %v761
  %v953 = vpack.c.b16 %v764, %v763
  %v954 = vpack.c.b16 %v766, %v765
  %v955 = vpack.c.b16 %v768, %v767
  %v956 = vpack.c.b16 %v770, %v769
  %v957 = vpack.c.b16 %v772, %v771
  %v958 = vpack.c.b16 %v774, %v773
  %v959 = vpack.c.b16 %v776, %v775
  %v960 = vpack.c.b16 %v778, %v777
  %v961 = vpack.c.b16 %v780, %v779
  %v962 = vpack.c.b16 %v782, %v781
  %v963 = vpack.c.b16 %v784, %v783
  %v964 = vpack.c.b16 %v786, %v785
  %v965 = vpack.c.b16 %v788, %v787
  %v966 = vpack.c.b16 %v790, %v789
  %v967 = vpack.c.b16 %v792, %v791
  %v968 = vpack.c.b16 %v794, %v793
  %v969 = vpack.c.b16 %v796, %v795
  %v970 = vpack.c.b16 %v798, %v797
  %v971 = vpack.c.b16 %v800, %v799
  %v972 = vpack.c.b16 %v802, %v801
  %v973 = vpack.c.b16 %v804, %v803
  %v974 = vpack.c.b16 %v806, %v805
  %v975 = vpack.c.b16 %v808, %v807
  %v976 = vpack.c.b16 %v810, %v809
  %v977 = vpack.c.b16 %v812, %v811
  %v978 = vpack.c.b16 %v814, %v813
  %v979 = vpack.c.b16 %v816, %v815
  %v980 = vpack.c.b16 %v818, %v817
  %v981 = vpack.c.b16 %v820, %v819
  %v982 = vpack.c.b16 %v822, %v821
  %v983 = vpack.c.b16 %v824, %v823
  %v984 = vpack.c.b16 %v826, %v825
  %v985 = vpack.c.b16 %v828, %v827
  %v986 = vpack.c.b16 %v830, %v829
  %v987 = vpack.c.b16 %v832, %v831
  %v988 = vpack.c.b16 %v834, %v833
  %v989 = vpack.c.b16 %v836, %v835
  %v990 = vpack.c.b16 %v838, %v837
  %v991 = vpack.c.b16 %v840, %v839
  %v992 = vpack.c.b16 %v842, %v841
  %v993 = vpack.c.b16 %v844, %v843
  %v994 = vpack.c.b16 %v846, %v845
  %v995 = vpack.c.b16 %v848, %v847
  %v996 = vpack.c.b16 %v850, %v849
  %v997 = vpack.c.b16 %v852, %v851
  %v998 = vpack.c.b16 %v854, %v853
  %v999 = vpack.c.b16 %v856, %v855
  %v1000 = vpack.c.b16 %v858, %v857
  %v1001 = vpack.c.b16 %v860, %v859
  %v1002 = vpack.c.b16 %v862, %v861
  %v1003 = vpack.c.b16 %v864, %v863
  %v1004 = vpack.c.b16 %v866, %v865
  %v1005 = vpack.c.b16 %v868, %v867
  %v1006 = vpack.c.b16 %v870, %v869
  %v1007 = vpack.c.b16 %v872, %v871
  %v1008 = vpack.c.b16 %v874, %v873
  %v1009 = vpack.c.b16 %v876, %v875
  %v1010 = vpack.c.b16 %v878, %v877
  %v1011 = vpack.c.b16 %v880, %v879
  %v1012 = vpack.c.b16 %v882, %v881
  %v1013 = vpack.c.b16 %v884, %v883
  %v1014 = vpack.c.b16 %v886, %v885
  %1143 = vmatprep.subr.bf16.mxu0 0
  %1144 = vmatpush1.bf16.msra.mxu0 %v887
  %1145 = vmatprep.subr.bf16.mxu0 0
  %1146 = vmatpush1.bf16.msra.mxu0 %v888
  %1147 = vmatprep.subr.bf16.mxu0 0
  %1148 = vmatpush1.bf16.msra.mxu0 %v889
  %1149 = vmatprep.subr.bf16.mxu0 0
  %1150 = vmatpush1.bf16.msra.mxu0 %v890
  %1151 = vmatprep.subr.bf16.mxu0 0
  %1152 = vmatpush1.bf16.msra.mxu0 %v891
  %1153 = vmatprep.subr.bf16.mxu0 0
  %1154 = vmatpush1.bf16.msra.mxu0 %v892
  %1155 = vmatprep.subr.bf16.mxu0 0
  %1156 = vmatpush1.bf16.msra.mxu0 %v893
  %1157 = vmatprep.subr.bf16.mxu0 0
  %1158 = vmatpush1.bf16.msra.mxu0 %v894
  %1159 = vmatprep.subr.bf16.mxu0 0
  %1160 = vmatpush1.bf16.msra.mxu0 %v895
  %1161 = vmatprep.subr.bf16.mxu0 0
  %1162 = vmatpush1.bf16.msra.mxu0 %v896
  %1163 = vmatprep.subr.bf16.mxu0 0
  %1164 = vmatpush1.bf16.msra.mxu0 %v897
  %1165 = vmatprep.subr.bf16.mxu0 0
  %1166 = vmatpush1.bf16.msra.mxu0 %v898
  %1167 = vmatprep.subr.bf16.mxu0 0
  %1168 = vmatpush1.bf16.msra.mxu0 %v899
  %1169 = vmatprep.subr.bf16.mxu0 0
  %1170 = vmatpush1.bf16.msra.mxu0 %v900
  %1171 = vmatprep.subr.bf16.mxu0 0
  %1172 = vmatpush1.bf16.msra.mxu0 %v901
  %1173 = vmatprep.subr.bf16.mxu0 0
  %1174 = vmatpush1.bf16.msra.mxu0 %v902
  %1175 = vmatprep.mubr.bf16.mxu0 %v344
  %1176 = vmatmul.mubr.bf16.gmra.mrb[0].mxu0 %v343
  %v1177 = vpop.f32.mrb[0].mxu0
  %v1178 = vadd.f32 0.0, %v1177
  %v1179 = vpop.f32.mrb[0].mxu0
  %v1180 = vpop.f32.mrb[0].mxu0
  %v1181 = vadd.f32 0.0, %v1180
  %v1182 = vpop.f32.mrb[0].mxu0
  %1183 = vdwg.mxu0
  %1184 = vmatprep.subr.bf16.mxu0 0
  %1185 = vmatpush1.bf16.msra.mxu0 %v903
  %1186 = vmatprep.subr.bf16.mxu0 0
  %1187 = vmatpush1.bf16.msra.mxu0 %v904
  %1188 = vmatprep.subr.bf16.mxu0 0
  %1189 = vmatpush1.bf16.msra.mxu0 %v905
  %1190 = vmatprep.subr.bf16.mxu0 0
  %1191 = vmatpush1.bf16.msra.mxu0 %v906
  %1192 = vmatprep.subr.bf16.mxu0 0
  %1193 = vmatpush1.bf16.msra.mxu0 %v907
  %1194 = vmatprep.subr.bf16.mxu0 0
  %1195 = vmatpush1.bf16.msra.mxu0 %v908
  %1196 = vmatprep.subr.bf16.mxu0 0
  %1197 = vmatpush1.bf16.msra.mxu0 %v909
  %1198 = vmatprep.subr.bf16.mxu0 0
  %1199 = vmatpush1.bf16.msra.mxu0 %v910
  %1200 = vmatprep.subr.bf16.mxu0 0
  %1201 = vmatpush1.bf16.msra.mxu0 %v911
  %1202 = vmatprep.subr.bf16.mxu0 0
  %1203 = vmatpush1.bf16.msra.mxu0 %v912
  %1204 = vmatprep.subr.bf16.mxu0 0
  %1205 = vmatpush1.bf16.msra.mxu0 %v913
  %1206 = vmatprep.subr.bf16.mxu0 0
  %1207 = vmatpush1.bf16.msra.mxu0 %v914
  %1208 = vmatprep.subr.bf16.mxu0 0
  %1209 = vmatpush1.bf16.msra.mxu0 %v915
  %1210 = vmatprep.subr.bf16.mxu0 0
  %1211 = vmatpush1.bf16.msra.mxu0 %v916
  %1212 = vmatprep.subr.bf16.mxu0 0
  %1213 = vmatpush1.bf16.msra.mxu0 %v917
  %1214 = vmatprep.subr.bf16.mxu0 0
  %1215 = vmatpush1.bf16.msra.mxu0 %v918
  %1216 = vmatprep.mubr.bf16.mxu0 %v346
  %1217 = vmatmul.mubr.bf16.gmra.mrb[0].mxu0 %v345
  %v1218 = vpop.f32.mrb[0].mxu0
  %v1219 = vadd.f32 %v1178, %v1218
  %v1220 = vpop.f32.mrb[0].mxu0
  %v1221 = vpop.f32.mrb[0].mxu0
  %v1222 = vadd.f32 %v1181, %v1221
  %v1223 = vpop.f32.mrb[0].mxu0
  %1224 = vdwg.mxu0
  %1225 = vmatprep.subr.bf16.mxu0 0
  %1226 = vmatpush1.bf16.msra.mxu0 %v919
  %1227 = vmatprep.subr.bf16.mxu0 0
  %1228 = vmatpush1.bf16.msra.mxu0 %v920
  %1229 = vmatprep.subr.bf16.mxu0 0
  %1230 = vmatpush1.bf16.msra.mxu0 %v921
  %1231 = vmatprep.subr.bf16.mxu0 0
  %1232 = vmatpush1.bf16.msra.mxu0 %v922
  %1233 = vmatprep.subr.bf16.mxu0 0
  %1234 = vmatpush1.bf16.msra.mxu0 %v923
  %1235 = vmatprep.subr.bf16.mxu0 0
  %1236 = vmatpush1.bf16.msra.mxu0 %v924
  %1237 = vmatprep.subr.bf16.mxu0 0
  %1238 = vmatpush1.bf16.msra.mxu0 %v925
  %1239 = vmatprep.subr.bf16.mxu0 0
  %1240 = vmatpush1.bf16.msra.mxu0 %v926
  %1241 = vmatprep.subr.bf16.mxu0 0
  %1242 = vmatpush1.bf16.msra.mxu0 %v927
  %1243 = vmatprep.subr.bf16.mxu0 0
  %1244 = vmatpush1.bf16.msra.mxu0 %v928
  %1245 = vmatprep.subr.bf16.mxu0 0
  %1246 = vmatpush1.bf16.msra.mxu0 %v929
  %1247 = vmatprep.subr.bf16.mxu0 0
  %1248 = vmatpush1.bf16.msra.mxu0 %v930
  %1249 = vmatprep.subr.bf16.mxu0 0
  %1250 = vmatpush1.bf16.msra.mxu0 %v931
  %1251 = vmatprep.subr.bf16.mxu0 0
  %1252 = vmatpush1.bf16.msra.mxu0 %v932
  %1253 = vmatprep.subr.bf16.mxu0 0
  %1254 = vmatpush1.bf16.msra.mxu0 %v933
  %1255 = vmatprep.subr.bf16.mxu0 0
  %1256 = vmatpush1.bf16.msra.mxu0 %v934
  %1257 = vmatprep.mubr.bf16.mxu0 %v348
  %1258 = vmatmul.mubr.bf16.gmra.mrb[0].mxu0 %v347
  %v1259 = vpop.f32.mrb[0].mxu0
  %v1260 = vadd.f32 %v1219, %v1259
  %v1261 = vpop.f32.mrb[0].mxu0
  %v1262 = vpop.f32.mrb[0].mxu0
  %v1263 = vadd.f32 %v1222, %v1262
  %v1264 = vpop.f32.mrb[0].mxu0
  %1265 = vdwg.mxu0
  %1266 = vmatprep.subr.bf16.mxu0 0
  %1267 = vmatpush1.bf16.msra.mxu0 %v935
  %1268 = vmatprep.subr.bf16.mxu0 0
  %1269 = vmatpush1.bf16.msra.mxu0 %v936
  %1270 = vmatprep.subr.bf16.mxu0 0
  %1271 = vmatpush1.bf16.msra.mxu0 %v937
  %1272 = vmatprep.subr.bf16.mxu0 0
  %1273 = vmatpush1.bf16.msra.mxu0 %v938
  %1274 = vmatprep.subr.bf16.mxu0 0
  %1275 = vmatpush1.bf16.msra.mxu0 %v939
  %1276 = vmatprep.subr.bf16.mxu0 0
  %1277 = vmatpush1.bf16.msra.mxu0 %v940
  %1278 = vmatprep.subr.bf16.mxu0 0
  %1279 = vmatpush1.bf16.msra.mxu0 %v941
  %1280 = vmatprep.subr.bf16.mxu0 0
  %1281 = vmatpush1.bf16.msra.mxu0 %v942
  %1282 = vmatprep.subr.bf16.mxu0 0
  %1283 = vmatpush1.bf16.msra.mxu0 %v943
  %1284 = vmatprep.subr.bf16.mxu0 0
  %1285 = vmatpush1.bf16.msra.mxu0 %v944
  %1286 = vmatprep.subr.bf16.mxu0 0
  %1287 = vmatpush1.bf16.msra.mxu0 %v945
  %1288 = vmatprep.subr.bf16.mxu0 0
  %1289 = vmatpush1.bf16.msra.mxu0 %v946
  %1290 = vmatprep.subr.bf16.mxu0 0
  %1291 = vmatpush1.bf16.msra.mxu0 %v947
  %1292 = vmatprep.subr.bf16.mxu0 0
  %1293 = vmatpush1.bf16.msra.mxu0 %v948
  %1294 = vmatprep.subr.bf16.mxu0 0
  %1295 = vmatpush1.bf16.msra.mxu0 %v949
  %1296 = vmatprep.subr.bf16.mxu0 0
  %1297 = vmatpush1.bf16.msra.mxu0 %v950
  %1298 = vmatprep.mubr.bf16.mxu0 %v350
  %1299 = vmatmul.mubr.bf16.gmra.mrb[0].mxu0 %v349
  %v1300 = vpop.f32.mrb[0].mxu0
  %v1301 = vadd.f32 %v1260, %v1300
  %v1302 = vpop.f32.mrb[0].mxu0
  %v1303 = vpop.f32.mrb[0].mxu0
  %v1304 = vadd.f32 %v1263, %v1303
  %v1305 = vpop.f32.mrb[0].mxu0
  %1306 = vdwg.mxu0
  %1307 = vmatprep.subr.bf16.mxu0 0
  %1308 = vmatpush1.bf16.msra.mxu0 %v951
  %1309 = vmatprep.subr.bf16.mxu0 0
  %1310 = vmatpush1.bf16.msra.mxu0 %v952
  %1311 = vmatprep.subr.bf16.mxu0 0
  %1312 = vmatpush1.bf16.msra.mxu0 %v953
  %1313 = vmatprep.subr.bf16.mxu0 0
  %1314 = vmatpush1.bf16.msra.mxu0 %v954
  %1315 = vmatprep.subr.bf16.mxu0 0
  %1316 = vmatpush1.bf16.msra.mxu0 %v955
  %1317 = vmatprep.subr.bf16.mxu0 0
  %1318 = vmatpush1.bf16.msra.mxu0 %v956
  %1319 = vmatprep.subr.bf16.mxu0 0
  %1320 = vmatpush1.bf16.msra.mxu0 %v957
  %1321 = vmatprep.subr.bf16.mxu0 0
  %1322 = vmatpush1.bf16.msra.mxu0 %v958
  %1323 = vmatprep.subr.bf16.mxu0 0
  %1324 = vmatpush1.bf16.msra.mxu0 %v959
  %1325 = vmatprep.subr.bf16.mxu0 0
  %1326 = vmatpush1.bf16.msra.mxu0 %v960
  %1327 = vmatprep.subr.bf16.mxu0 0
  %1328 = vmatpush1.bf16.msra.mxu0 %v961
  %1329 = vmatprep.subr.bf16.mxu0 0
  %1330 = vmatpush1.bf16.msra.mxu0 %v962
  %1331 = vmatprep.subr.bf16.mxu0 0
  %1332 = vmatpush1.bf16.msra.mxu0 %v963
  %1333 = vmatprep.subr.bf16.mxu0 0
  %1334 = vmatpush1.bf16.msra.mxu0 %v964
  %1335 = vmatprep.subr.bf16.mxu0 0
  %1336 = vmatpush1.bf16.msra.mxu0 %v965
  %1337 = vmatprep.subr.bf16.mxu0 0
  %1338 = vmatpush1.bf16.msra.mxu0 %v966
  %1339 = vmatprep.mubr.bf16.mxu0 %v352
  %1340 = vmatmul.mubr.bf16.gmra.mrb[0].mxu0 %v351
  %v1341 = vpop.f32.mrb[0].mxu0
  %v1342 = vadd.f32 %v1301, %v1341
  %v1343 = vpop.f32.mrb[0].mxu0
  %v1344 = vpop.f32.mrb[0].mxu0
  %v1345 = vadd.f32 %v1304, %v1344
  %v1346 = vpop.f32.mrb[0].mxu0
  %1347 = vdwg.mxu0
  %1348 = vmatprep.subr.bf16.mxu0 0
  %1349 = vmatpush1.bf16.msra.mxu0 %v967
  %1350 = vmatprep.subr.bf16.mxu0 0
  %1351 = vmatpush1.bf16.msra.mxu0 %v968
  %1352 = vmatprep.subr.bf16.mxu0 0
  %1353 = vmatpush1.bf16.msra.mxu0 %v969
  %1354 = vmatprep.subr.bf16.mxu0 0
  %1355 = vmatpush1.bf16.msra.mxu0 %v970
  %1356 = vmatprep.subr.bf16.mxu0 0
  %1357 = vmatpush1.bf16.msra.mxu0 %v971
  %1358 = vmatprep.subr.bf16.mxu0 0
  %1359 = vmatpush1.bf16.msra.mxu0 %v972
  %1360 = vmatprep.subr.bf16.mxu0 0
  %1361 = vmatpush1.bf16.msra.mxu0 %v973
  %1362 = vmatprep.subr.bf16.mxu0 0
  %1363 = vmatpush1.bf16.msra.mxu0 %v974
  %1364 = vmatprep.subr.bf16.mxu0 0
  %1365 = vmatpush1.bf16.msra.mxu0 %v975
  %1366 = vmatprep.subr.bf16.mxu0 0
  %1367 = vmatpush1.bf16.msra.mxu0 %v976
  %1368 = vmatprep.subr.bf16.mxu0 0
  %1369 = vmatpush1.bf16.msra.mxu0 %v977
  %1370 = vmatprep.subr.bf16.mxu0 0
  %1371 = vmatpush1.bf16.msra.mxu0 %v978
  %1372 = vmatprep.subr.bf16.mxu0 0
  %1373 = vmatpush1.bf16.msra.mxu0 %v979
  %1374 = vmatprep.subr.bf16.mxu0 0
  %1375 = vmatpush1.bf16.msra.mxu0 %v980
  %1376 = vmatprep.subr.bf16.mxu0 0
  %1377 = vmatpush1.bf16.msra.mxu0 %v981
  %1378 = vmatprep.subr.bf16.mxu0 0
  %1379 = vmatpush1.bf16.msra.mxu0 %v982
  %1380 = vmatprep.mubr.bf16.mxu0 %v354
  %1381 = vmatmul.mubr.bf16.gmra.mrb[0].mxu0 %v353
  %v1382 = vpop.f32.mrb[0].mxu0
  %v1383 = vadd.f32 %v1342, %v1382
  %v1384 = vpop.f32.mrb[0].mxu0
  %v1385 = vpop.f32.mrb[0].mxu0
  %v1386 = vadd.f32 %v1345, %v1385
  %v1387 = vpop.f32.mrb[0].mxu0
  %1388 = vdwg.mxu0
  %1389 = vmatprep.subr.bf16.mxu0 0
  %1390 = vmatpush1.bf16.msra.mxu0 %v983
  %1391 = vmatprep.subr.bf16.mxu0 0
  %1392 = vmatpush1.bf16.msra.mxu0 %v984
  %1393 = vmatprep.subr.bf16.mxu0 0
  %1394 = vmatpush1.bf16.msra.mxu0 %v985
  %1395 = vmatprep.subr.bf16.mxu0 0
  %1396 = vmatpush1.bf16.msra.mxu0 %v986
  %1397 = vmatprep.subr.bf16.mxu0 0
  %1398 = vmatpush1.bf16.msra.mxu0 %v987
  %1399 = vmatprep.subr.bf16.mxu0 0
  %1400 = vmatpush1.bf16.msra.mxu0 %v988
  %1401 = vmatprep.subr.bf16.mxu0 0
  %1402 = vmatpush1.bf16.msra.mxu0 %v989
  %1403 = vmatprep.subr.bf16.mxu0 0
  %1404 = vmatpush1.bf16.msra.mxu0 %v990
  %1405 = vmatprep.subr.bf16.mxu0 0
  %1406 = vmatpush1.bf16.msra.mxu0 %v991
  %1407 = vmatprep.subr.bf16.mxu0 0
  %1408 = vmatpush1.bf16.msra.mxu0 %v992
  %1409 = vmatprep.subr.bf16.mxu0 0
  %1410 = vmatpush1.bf16.msra.mxu0 %v993
  %1411 = vmatprep.subr.bf16.mxu0 0
  %1412 = vmatpush1.bf16.msra.mxu0 %v994
  %1413 = vmatprep.subr.bf16.mxu0 0
  %1414 = vmatpush1.bf16.msra.mxu0 %v995
  %1415 = vmatprep.subr.bf16.mxu0 0
  %1416 = vmatpush1.bf16.msra.mxu0 %v996
  %1417 = vmatprep.subr.bf16.mxu0 0
  %1418 = vmatpush1.bf16.msra.mxu0 %v997
  %1419 = vmatprep.subr.bf16.mxu0 0
  %1420 = vmatpush1.bf16.msra.mxu0 %v998
  %1421 = vmatprep.mubr.bf16.mxu0 %v356
  %1422 = vmatmul.mubr.bf16.gmra.mrb[0].mxu0 %v355
  %v1423 = vpop.f32.mrb[0].mxu0
  %v1424 = vadd.f32 %v1383, %v1423
  %v1425 = vpop.f32.mrb[0].mxu0
  %v1426 = vpop.f32.mrb[0].mxu0
  %v1427 = vadd.f32 %v1386, %v1426
  %v1428 = vpop.f32.mrb[0].mxu0
  %1429 = vdwg.mxu0
  %1430 = vmatprep.subr.bf16.mxu0 0
  %1431 = vmatpush1.bf16.msra.mxu0 %v999
  %1432 = vmatprep.subr.bf16.mxu0 0
  %1433 = vmatpush1.bf16.msra.mxu0 %v1000
  %1434 = vmatprep.subr.bf16.mxu0 0
  %1435 = vmatpush1.bf16.msra.mxu0 %v1001
  %1436 = vmatprep.subr.bf16.mxu0 0
  %1437 = vmatpush1.bf16.msra.mxu0 %v1002
  %1438 = vmatprep.subr.bf16.mxu0 0
  %1439 = vmatpush1.bf16.msra.mxu0 %v1003
  %1440 = vmatprep.subr.bf16.mxu0 0
  %1441 = vmatpush1.bf16.msra.mxu0 %v1004
  %1442 = vmatprep.subr.bf16.mxu0 0
  %1443 = vmatpush1.bf16.msra.mxu0 %v1005
  %1444 = vmatprep.subr.bf16.mxu0 0
  %1445 = vmatpush1.bf16.msra.mxu0 %v1006
  %1446 = vmatprep.subr.bf16.mxu0 0
  %1447 = vmatpush1.bf16.msra.mxu0 %v1007
  %1448 = vmatprep.subr.bf16.mxu0 0
  %1449 = vmatpush1.bf16.msra.mxu0 %v1008
  %1450 = vmatprep.subr.bf16.mxu0 0
  %1451 = vmatpush1.bf16.msra.mxu0 %v1009
  %1452 = vmatprep.subr.bf16.mxu0 0
  %1453 = vmatpush1.bf16.msra.mxu0 %v1010
  %1454 = vmatprep.subr.bf16.mxu0 0
  %1455 = vmatpush1.bf16.msra.mxu0 %v1011
  %1456 = vmatprep.subr.bf16.mxu0 0
  %1457 = vmatpush1.bf16.msra.mxu0 %v1012
  %1458 = vmatprep.subr.bf16.mxu0 0
  %1459 = vmatpush1.bf16.msra.mxu0 %v1013
  %1460 = vmatprep.subr.bf16.mxu0 0
  %1461 = vmatpush1.bf16.msra.mxu0 %v1014
  %1462 = vmatprep.mubr.bf16.mxu0 %v358
  %1463 = vmatmul.mubr.bf16.gmra.mrb[0].mxu0 %v357
  %v1464 = vpop.f32.mrb[0].mxu0
  %v1465 = vadd.f32 %v1424, %v1464
  %v1466 = vpop.f32.mrb[0].mxu0
  %v1467 = vpop.f32.mrb[0].mxu0
  %v1468 = vadd.f32 %v1427, %v1467
  %v1469 = vpop.f32.mrb[0].mxu0
  %1470 = vdwg.mxu0
  %v1471 = vadd.f32 %v21, %v1465
  %v1472 = vadd.f32 %v22, %v1468
  %1473 = vst [vmem:[#allocation2] sm:$0xff] %v1471
  %1474 = vst [vmem:[#allocation2 + $0x8] sm:$0xff] %v1472
  // Predicated region
  $region18: #{striding_conv_subsampling.5} parent=0 // pred_check
    %p1475 = pneg %p15
  $region19: #{striding_conv_subsampling.5} parent=0 // pred_check_branch
    %1477 = sbr.rel (%p1475) target = $region21
  $region20: #{striding_conv_subsampling.5} parent=0 // pred_region
    %v1478 = vld [vmem:[#allocation2] sm:$0xff]
    %v1479 = vld [vmem:[#allocation2 + $0x8] sm:$0xff]
    %v1480 = vld [vmem:[%s2] sm:$0x1]
    %v1482 = vlaneseq
    %v1483 = vshrl.u32 %v1482, 7
    %v1484 = vsub.s32 0, %v1483
    %v1485 = vrot.slane %v1480, %v1484
    %v1487 = vadd.f32 %v1478, %v1485
    %v1488 = vadd.f32 %v1479, %v1485
    %1489 = vst [vmem:[%s3] sm:$0xff] %v1487
    %1490 = vst [vmem:[%s3 + $0x8] sm:$0xff] %v1488
  $region21: #{striding_conv_subsampling.5} parent=0 // pred_fallthru
    _
  // Predicated region
  $region22: #{striding_conv_subsampling.5} parent=0 // pred_check
    _
  $region23: #{striding_conv_subsampling.5} parent=0 // pred_check_branch
    %1492 = sbr.rel (0) target = $region25
  $region24: #{striding_conv_subsampling.5} parent=0 // pred_region
    _
  $region25: #{striding_conv_subsampling.5} parent=0 // pred_fallthru
    _
  // Predicated region
  $region26: #{striding_conv_subsampling.5} parent=0 // pred_check
    _
  $region27: #{striding_conv_subsampling.5} parent=0 // pred_check_branch
    %1494 = sbr.rel (0) target = $region29
  $region28: #{striding_conv_subsampling.5} parent=0 // pred_region
    _
  $region29: #{striding_conv_subsampling.5} parent=0 // pred_fallthru
    _

</llo_original>
